<compile_context>
chip_gen: v5e
topology: v5e:2x2
jax: 0.10.0
libtpu: 0.0.40
codegen_flags: <defaults>
</compile_context>

<pallas_src>
import functools

import jax
import jax.numpy as jnp
from jax.experimental import pallas as pl
from jax.experimental.pallas import tpu as pltpu


def _round_up(a, b):
    return (a + b - 1) // b * b


_TILE_BYTES = 6 * 1024 * 1024      # per-buffer cap for the streaming HW tiles
_VMEM_LIMIT = 32 * 1024 * 1024     # scoped-VMEM request (safe on v5e/v6e/v7x)


# ---------------------------------------------------------------------------
# Kernel 1: streaming channel pooling (avg & max over H*W) + fused shared MLP
#           x: (N, C, HW)  ->  ca: (N, C, 1)  (already sigmoid'd)
# ---------------------------------------------------------------------------
def _ca_kernel(x_ref, w1_ref, b1_ref, w2_ref, b2_ref, ca_ref, sum_acc, max_acc,
               *, hw_true, hw_tile, needs_mask):
    k = pl.program_id(1)
    last = pl.num_programs(1) - 1

    @pl.when(k == 0)
    def _():
        sum_acc[...] = jnp.zeros_like(sum_acc)
        max_acc[...] = jnp.full_like(max_acc, -jnp.inf)

    x = x_ref[0]                                         # (C, hw_tile), native dtype

    # Zero padding contributes nothing to the sum -> the sum path is never masked.
    sum_acc[...] += jnp.sum(x, axis=-1, keepdims=True, dtype=jnp.float32)

    def _unmasked_max():
        max_acc[...] = jnp.maximum(
            max_acc[...], jnp.max(x, axis=-1, keepdims=True).astype(jnp.float32))

    if needs_mask:
        # Only the final HW tile contains padding: mask it there, nowhere else.
        pl.when(k != last)(_unmasked_max)

        @pl.when(k == last)
        def _():
            col = jax.lax.broadcasted_iota(jnp.int32, x.shape, 1) + k * hw_tile
            xm = jnp.where(col < hw_true, x, jnp.asarray(-jnp.inf, x.dtype))
            max_acc[...] = jnp.maximum(
                max_acc[...],
                jnp.max(xm, axis=-1, keepdims=True).astype(jnp.float32))
    else:
        _unmasked_max()

    # Epilogue: shared MLP on both pooling branches + sigmoid (fc(avg)+fc(max) ==
    # w2 @ (relu(w1@avg+b1) + relu(w1@max+b1)) + 2*b2), so only the tiny (C,)
    # attention vector ever goes back to HBM.
    @pl.when(k == last)
    def _():
        avg = sum_acc[...] * (1.0 / hw_true)             # (C, 1) f32
        mx = max_acc[...]                                # (C, 1) f32
        h = (jnp.maximum(
                jnp.dot(w1_ref[...], avg, preferred_element_type=jnp.float32)
                + b1_ref[...], 0.0)
             + jnp.maximum(
                jnp.dot(w1_ref[...], mx, preferred_element_type=jnp.float32)
                + b1_ref[...], 0.0))                     # (Cr, 1)
        y = (jnp.dot(w2_ref[...], h, preferred_element_type=jnp.float32)
             + 2.0 * b2_ref[...])                        # (C, 1)
        ca_ref[...] = jax.nn.sigmoid(y)[None]            # (1, C, 1)


def _channel_attention(x_r, w1, b1, w2, b2):
    n, c, hw = x_r.shape
    cr = w1.shape[0]
    itemsize = jnp.dtype(x_r.dtype).itemsize

    hw_aligned = _round_up(hw, 128)
    cap_tile = max(128, (_TILE_BYTES // max(c * itemsize, 1)) // 128 * 128)
    hw_tile = min(hw_aligned, cap_tile)
    hw_pad = _round_up(hw, hw_tile)
    if hw_pad != hw:
        x_r = jnp.pad(x_r, ((0, 0), (0, 0), (0, hw_pad - hw)))
    needs_mask = hw_pad != hw

    kernel = functools.partial(_ca_kernel, hw_true=hw, hw_tile=hw_tile,
                               needs_mask=needs_mask)
    return pl.pallas_call(
        kernel,
        out_shape=jax.ShapeDtypeStruct((n, c, 1), jnp.float32),
        grid_spec=pltpu.PrefetchScalarGridSpec(
            num_scalar_prefetch=0,
            grid=(n, hw_pad // hw_tile),
            in_specs=[
                pl.BlockSpec((1, c, hw_tile), lambda i, k: (i, 0, k)),
                pl.BlockSpec((cr, c), lambda i, k: (0, 0)),
                pl.BlockSpec((cr, 1), lambda i, k: (0, 0)),
                pl.BlockSpec((c, cr), lambda i, k: (0, 0)),
                pl.BlockSpec((c, 1), lambda i, k: (0, 0)),
            ],
            out_specs=pl.BlockSpec((1, c, 1), lambda i, k: (i, 0, 0)),
            scratch_shapes=[pltpu.VMEM((c, 1), jnp.float32),
                            pltpu.VMEM((c, 1), jnp.float32)],
        ),
        compiler_params=pltpu.CompilerParams(
            dimension_semantics=("parallel", "arbitrary"),
            vmem_limit_bytes=_VMEM_LIMIT),
    )(x_r, w1, b1, w2, b2)


# ---------------------------------------------------------------------------
# Kernel 2: lane-dense apply — ca scale, channel mean/max, spatial attention
#           (7x7 conv folded into two MXU matmuls), final product.
# ---------------------------------------------------------------------------
def _apply_kernel(x_ref, ca_ref, mm_ref, mx_ref, b_ref, o_ref, *, inv_c):
    x1 = x_ref[0].astype(jnp.float32) * ca_ref[0]                    # (C, HW)
    mean_row = jnp.sum(x1, axis=0, keepdims=True) * inv_c            # (1, HW)
    max_row = jnp.max(x1, axis=0, keepdims=True)                     # (1, HW)
    pre = (jnp.dot(mean_row, mm_ref[...], preferred_element_type=jnp.float32)
           + jnp.dot(max_row, mx_ref[...], preferred_element_type=jnp.float32)
           + b_ref[...])                                             # (1, HW)
    sa = jax.nn.sigmoid(pre)
    o_ref[...] = (x1 * sa)[None].astype(o_ref.dtype)


def _build_conv_matrices(sa_w, h, w):
    """Fold the KxK (2->1 channel, zero-padded) conv into two (HW, HW) matrices so the
    spatial attention is two matmuls on the lane-dense (1, HW) channel stats."""
    k = sa_w.shape[-1]
    p = k // 2
    hw = h * w
    pos = jnp.arange(hw, dtype=jnp.int32)
    row = pos // w
    col = pos % w
    dy = row[:, None] - row[None, :] + p          # (HW_in, HW_out)
    dx = col[:, None] - col[None, :] + p
    valid = (dy >= 0) & (dy < k) & (dx >= 0) & (dx < k)
    dyc = jnp.clip(dy, 0, k - 1)
    dxc = jnp.clip(dx, 0, k - 1)
    wf = jnp.asarray(sa_w, jnp.float32).reshape(2, k, k)
    m_mean = jnp.where(valid, wf[0][dyc, dxc], 0.0)
    m_max = jnp.where(valid, wf[1][dyc, dxc], 0.0)
    return m_mean, m_max


def _cbam_apply(x_r, ca, m_mean, m_max, sa_b):
    n, c, hw = x_r.shape
    b = jnp.asarray(sa_b, jnp.float32).reshape(1, 1)
    kernel = functools.partial(_apply_kernel, inv_c=1.0 / c)
    # TODO(synk): for N==1 on v7x, add a second parallel grid axis (C chunks for the
    # elementwise phases) so both TensorCores get work.
    return pl.pallas_call(
        kernel,
        out_shape=jax.ShapeDtypeStruct((n, c, hw), x_r.dtype),
        grid_spec=pltpu.PrefetchScalarGridSpec(
            num_scalar_prefetch=0,
            grid=(n,),
            in_specs=[
                pl.BlockSpec((1, c, hw), lambda i: (i, 0, 0)),
                pl.BlockSpec((1, c, 1), lambda i: (i, 0, 0)),
                pl.BlockSpec((hw, hw), lambda i: (0, 0)),
                pl.BlockSpec((hw, hw), lambda i: (0, 0)),
                pl.BlockSpec((1, 1), lambda i: (0, 0)),
            ],
            out_specs=pl.BlockSpec((1, c, hw), lambda i: (i, 0, 0)),
        ),
        compiler_params=pltpu.CompilerParams(
            dimension_semantics=("parallel",),
            vmem_limit_bytes=_VMEM_LIMIT),
    )(x_r, ca, m_mean, m_max, b)


# ---------------------------------------------------------------------------
# Full CBAM forward
# ---------------------------------------------------------------------------
def cbam_forward(x, ca_w1, ca_b1, ca_w2, ca_b2, sa_w, sa_b):
    n, c, h, w = x.shape
    hw = h * w
    x_r = x.reshape(n, c, hw)                 # lane axis = H*W (free, row-major)

    w1 = jnp.asarray(ca_w1, jnp.float32).reshape(-1, c)   # (Cr, C)
    w2 = jnp.asarray(ca_w2, jnp.float32).reshape(c, -1)   # (C, Cr)
    cr = w1.shape[0]
    b1 = jnp.asarray(ca_b1, jnp.float32).reshape(cr, 1)
    b2 = jnp.asarray(ca_b2, jnp.float32).reshape(c, 1)

    ca = _channel_attention(x_r, w1, b1, w2, b2)          # (N, C, 1) f32, sigmoid'd
    m_mean, m_max = _build_conv_matrices(sa_w, h, w)
    out_r = _cbam_apply(x_r, ca, m_mean, m_max, sa_b)     # (N, C, HW)
    return out_r.reshape(n, c, h, w)


# ---------------------------------------------------------------------------
# Pure-JAX reference of the PyTorch CBAM forward (for validation)
# ---------------------------------------------------------------------------
def _reference_cbam(x, ca_w1, ca_b1, ca_w2, ca_b2, sa_w, sa_b):
    avg = jnp.mean(x, axis=(2, 3))
    mx = jnp.max(x, axis=(2, 3))

    def fc(v):
        h = jnp.maximum(v @ ca_w1.T + ca_b1, 0.0)
        return h @ ca_w2.T + ca_b2

    ca = jax.nn.sigmoid(fc(avg) + fc(mx))[:, :, None, None]
    x1 = ca * x

    mean_c = jnp.mean(x1, axis=1, keepdims=True)
    max_c = jnp.max(x1, axis=1, keepdims=True)
    stats = jnp.concatenate([mean_c, max_c], axis=1)              # (N, 2, H, W)
    p = sa_w.shape[-1] // 2
    conv = jax.lax.conv_general_dilated(
        stats, sa_w, window_strides=(1, 1), padding=((p, p), (p, p)),
        dimension_numbers=("NCHW", "OIHW", "NCHW"))
    sa = jax.nn.sigmoid(conv + sa_b.reshape(1, 1, 1, 1))
    return sa * x1


if __name__ == "__main__":
    # CBAM config: in_channels=4, ratio=2 (hidden=2), spatial kernel_size=7.
    N, C, H, W = 2, 4, 16, 16
    ratio = 2
    Cr = C // ratio
    K = 7

    key = jax.random.PRNGKey(0)
    kx, k1, k2, k3, k4, k5, k6 = jax.random.split(key, 7)
    x = jax.random.normal(kx, (N, C, H, W), dtype=jnp.float32)

    b1b = 1.0 / (C ** 0.5)
    ca_w1 = jax.random.uniform(k1, (Cr, C), jnp.float32, -b1b, b1b)
    ca_b1 = jax.random.uniform(k2, (Cr,), jnp.float32, -b1b, b1b)
    b2b = 1.0 / (Cr ** 0.5)
    ca_w2 = jax.random.uniform(k3, (C, Cr), jnp.float32, -b2b, b2b)
    ca_b2 = jax.random.uniform(k4, (C,), jnp.float32, -b2b, b2b)
    b3b = 1.0 / ((2 * K * K) ** 0.5)
    sa_w = jax.random.uniform(k5, (1, 2, K, K), jnp.float32, -b3b, b3b)
    sa_b = jax.random.uniform(k6, (1,), jnp.float32, -b3b, b3b)

    fwd = jax.jit(cbam_forward)
    out = jax.block_until_ready(fwd(x, ca_w1, ca_b1, ca_w2, ca_b2, sa_w, sa_b))

    ref = _reference_cbam(x, ca_w1, ca_b1, ca_w2, ca_b2, sa_w, sa_b)
    assert out.shape == (N, C, H, W)
    assert jnp.allclose(out, ref, atol=1e-4, rtol=1e-4), "mismatch vs reference"

    print("KERNEL_OK")
</pallas_src>

<mosaic_0001>
module attributes {stable_mosaic.version = 11 : i64} {
  func.func @_ca_kernel(%arg0: i32, %arg1: i32, %arg2: memref<1x4x256xf32, #tpu.memory_space<vmem>>, %arg3: memref<2x4xf32, #tpu.memory_space<vmem>>, %arg4: memref<2x1xf32, #tpu.memory_space<vmem>>, %arg5: memref<4x2xf32, #tpu.memory_space<vmem>>, %arg6: memref<4x1xf32, #tpu.memory_space<vmem>>, %arg7: memref<1x4x1xf32, #tpu.memory_space<vmem>>, %arg8: memref<4x1xf32, #tpu.memory_space<vmem>>, %arg9: memref<4x1xf32, #tpu.memory_space<vmem>>) attributes {dimension_semantics = [#tpu.dimension_semantics<parallel>, #tpu.dimension_semantics<arbitrary>], iteration_bounds = array<i64: 2, 1>, scalar_prefetch = 0 : i64, scratch_operands = 2 : i64, tpu.core_type = #tpu.core_type<tc>, window_params = [{transform_indices = @transform_0, window_bounds = array<i64: 1, 4, 256>}, {pipeline_mode = #tpu.pipeline_mode<synchronous>, transform_indices = @transform_1, window_bounds = array<i64: 2, 4>}, {pipeline_mode = #tpu.pipeline_mode<synchronous>, transform_indices = @transform_2, window_bounds = array<i64: 2, 1>}, {pipeline_mode = #tpu.pipeline_mode<synchronous>, transform_indices = @transform_3, window_bounds = array<i64: 4, 2>}, {pipeline_mode = #tpu.pipeline_mode<synchronous>, transform_indices = @transform_4, window_bounds = array<i64: 4, 1>}, {transform_indices = @transform_5, window_bounds = array<i64: 1, 4, 1>}]} {
    %c0_i32 = arith.constant 0 : i32
    %0 = arith.cmpi eq, %arg1, %c0_i32 : i32
    %1 = arith.extui %0 : i1 to i32
    %c0_i32_0 = arith.constant 0 : i32
    %2 = arith.cmpi ne, %1, %c0_i32_0 : i32
    scf.if %2 {
      %cst_14 = arith.constant 0.000000e+00 : f32
      %18 = vector.broadcast %cst_14 : f32 to vector<4x1xf32>
      %c0_15 = arith.constant 0 : index
      %c0_16 = arith.constant 0 : index
      %19 = vector.load %arg8[%c0_15, %c0_16] : memref<4x1xf32, #tpu.memory_space<vmem>>, vector<4x1xf32>
      tpu.vector_store %arg8[%c0_15, %c0_16], %18 {strides = array<i32>} : memref<4x1xf32, #tpu.memory_space<vmem>>, vector<4x1xf32>,
      %cst_17 = arith.constant 0xFF800000 : f32
      %20 = vector.broadcast %cst_17 : f32 to vector<4x1xf32>
      %c0_18 = arith.constant 0 : index
      %c0_19 = arith.constant 0 : index
      %21 = vector.load %arg9[%c0_18, %c0_19] : memref<4x1xf32, #tpu.memory_space<vmem>>, vector<4x1xf32>
      tpu.vector_store %arg9[%c0_18, %c0_19], %20 {strides = array<i32>} : memref<4x1xf32, #tpu.memory_space<vmem>>, vector<4x1xf32>,
    } else {
    }
    %c0 = arith.constant 0 : index
    %c0_1 = arith.constant 0 : index
    %c0_2 = arith.constant 0 : index
    %3 = vector.load %arg2[%c0, %c0_1, %c0_2] : memref<1x4x256xf32, #tpu.memory_space<vmem>>, vector<1x4x256xf32>
    %4 = vector.shape_cast %3 : vector<1x4x256xf32> to vector<4x256xf32>
    %c0_3 = arith.constant 0 : index
    %c0_4 = arith.constant 0 : index
    %5 = vector.load %arg8[%c0_3, %c0_4] : memref<4x1xf32, #tpu.memory_space<vmem>>, vector<4x1xf32>
    %cst = arith.constant dense<0.000000e+00> : vector<4xf32>
    %6 = vector.multi_reduction <add>, %4, %cst [1] : vector<4x256xf32> to vector<4xf32>
    %7 = vector.shape_cast %6 : vector<4xf32> to vector<4x1xf32>
    %8 = arith.addf %5, %7 : vector<4x1xf32>
    %c0_5 = arith.constant 0 : index
    %c0_6 = arith.constant 0 : index
    %9 = vector.load %arg8[%c0_5, %c0_6] : memref<4x1xf32, #tpu.memory_space<vmem>>, vector<4x1xf32>
    tpu.vector_store %arg8[%c0_5, %c0_6], %8 {strides = array<i32>} : memref<4x1xf32, #tpu.memory_space<vmem>>, vector<4x1xf32>,
    %c0_7 = arith.constant 0 : index
    %c0_8 = arith.constant 0 : index
    %10 = vector.load %arg9[%c0_7, %c0_8] : memref<4x1xf32, #tpu.memory_space<vmem>>, vector<4x1xf32>
    %cst_9 = arith.constant dense<0xFF800000> : vector<4xf32>
    %11 = vector.multi_reduction <maximumf>, %4, %cst_9 [1] : vector<4x256xf32> to vector<4xf32>
    %12 = vector.shape_cast %11 : vector<4xf32> to vector<4x1xf32>
    %13 = arith.maximumf %10, %12 : vector<4x1xf32>
    %c0_10 = arith.constant 0 : index
    %c0_11 = arith.constant 0 : index
    %14 = vector.load %arg9[%c0_10, %c0_11] : memref<4x1xf32, #tpu.memory_space<vmem>>, vector<4x1xf32>
    tpu.vector_store %arg9[%c0_10, %c0_11], %13 {strides = array<i32>} : memref<4x1xf32, #tpu.memory_space<vmem>>, vector<4x1xf32>,
    %c0_i32_12 = arith.constant 0 : i32
    %15 = arith.cmpi eq, %arg1, %c0_i32_12 : i32
    %16 = arith.extui %15 : i1 to i32
    %c0_i32_13 = arith.constant 0 : i32
    %17 = arith.cmpi ne, %16, %c0_i32_13 : i32
    scf.if %17 {
      %c0_14 = arith.constant 0 : index
      %c0_15 = arith.constant 0 : index
      %18 = vector.load %arg8[%c0_14, %c0_15] : memref<4x1xf32, #tpu.memory_space<vmem>>, vector<4x1xf32>
      %cst_16 = arith.constant 3.906250e-03 : f32
      %19 = vector.broadcast %cst_16 : f32 to vector<4x1xf32>
      %20 = arith.mulf %18, %19 : vector<4x1xf32>
      %c0_17 = arith.constant 0 : index
      %c0_18 = arith.constant 0 : index
      %21 = vector.load %arg9[%c0_17, %c0_18] : memref<4x1xf32, #tpu.memory_space<vmem>>, vector<4x1xf32>
      %c0_19 = arith.constant 0 : index
      %c0_20 = arith.constant 0 : index
      %22 = vector.load %arg3[%c0_19, %c0_20] : memref<2x4xf32, #tpu.memory_space<vmem>>, vector<2x4xf32>
      %cst_21 = arith.constant dense<0.000000e+00> : vector<2x1xf32>
      %23 = tpu.matmul %22, %20, %cst_21 {dimension_numbers = #tpu.dot_dimension_numbers<[1], [0], [0], [1], [0, 0, 1, 1], [], []>} : vector<2x4xf32>, vector<4x1xf32>, vector<2x1xf32> -> vector<2x1xf32>
      %c0_22 = arith.constant 0 : index
      %c0_23 = arith.constant 0 : index
      %24 = vector.load %arg4[%c0_22, %c0_23] : memref<2x1xf32, #tpu.memory_space<vmem>>, vector<2x1xf32>
      %25 = arith.addf %23, %24 : vector<2x1xf32>
      %cst_24 = arith.constant 0.000000e+00 : f32
      %26 = vector.broadcast %cst_24 : f32 to vector<2x1xf32>
      %27 = arith.maximumf %25, %26 : vector<2x1xf32>
      %c0_25 = arith.constant 0 : index
      %c0_26 = arith.constant 0 : index
      %28 = vector.load %arg3[%c0_25, %c0_26] : memref<2x4xf32, #tpu.memory_space<vmem>>, vector<2x4xf32>
      %cst_27 = arith.constant dense<0.000000e+00> : vector<2x1xf32>
      %29 = tpu.matmul %28, %21, %cst_27 {dimension_numbers = #tpu.dot_dimension_numbers<[1], [0], [0], [1], [0, 0, 1, 1], [], []>} : vector<2x4xf32>, vector<4x1xf32>, vector<2x1xf32> -> vector<2x1xf32>
      %c0_28 = arith.constant 0 : index
      %c0_29 = arith.constant 0 : index
      %30 = vector.load %arg4[%c0_28, %c0_29] : memref<2x1xf32, #tpu.memory_space<vmem>>, vector<2x1xf32>
      %31 = arith.addf %29, %30 : vector<2x1xf32>
      %cst_30 = arith.constant 0.000000e+00 : f32
      %32 = vector.broadcast %cst_30 : f32 to vector<2x1xf32>
      %33 = arith.maximumf %31, %32 : vector<2x1xf32>
      %34 = arith.addf %27, %33 : vector<2x1xf32>
      %c0_31 = arith.constant 0 : index
      %c0_32 = arith.constant 0 : index
      %35 = vector.load %arg5[%c0_31, %c0_32] : memref<4x2xf32, #tpu.memory_space<vmem>>, vector<4x2xf32>
      %cst_33 = arith.constant dense<0.000000e+00> : vector<4x1xf32>
      %36 = tpu.matmul %35, %34, %cst_33 {dimension_numbers = #tpu.dot_dimension_numbers<[1], [0], [0], [1], [0, 0, 1, 1], [], []>} : vector<4x2xf32>, vector<2x1xf32>, vector<4x1xf32> -> vector<4x1xf32>
      %c0_34 = arith.constant 0 : index
      %c0_35 = arith.constant 0 : index
      %37 = vector.load %arg6[%c0_34, %c0_35] : memref<4x1xf32, #tpu.memory_space<vmem>>, vector<4x1xf32>
      %cst_36 = arith.constant 2.000000e+00 : f32
      %38 = vector.broadcast %cst_36 : f32 to vector<4x1xf32>
      %39 = arith.mulf %38, %37 : vector<4x1xf32>
      %40 = arith.addf %36, %39 : vector<4x1xf32>
      %41 = arith.negf %40 : vector<4x1xf32>
      %42 = math.exp %41 : vector<4x1xf32>
      %cst_37 = arith.constant 1.000000e+00 : f32
      %43 = vector.broadcast %cst_37 : f32 to vector<4x1xf32>
      %44 = arith.addf %43, %42 : vector<4x1xf32>
      %45 = arith.divf %43, %44 : vector<4x1xf32>
      %46 = vector.shape_cast %45 : vector<4x1xf32> to vector<1x4x1xf32>
      %c0_38 = arith.constant 0 : index
      %c0_39 = arith.constant 0 : index
      %c0_40 = arith.constant 0 : index
      %47 = vector.load %arg7[%c0_38, %c0_39, %c0_40] : memref<1x4x1xf32, #tpu.memory_space<vmem>>, vector<1x4x1xf32>
      tpu.vector_store %arg7[%c0_38, %c0_39, %c0_40], %46 {strides = array<i32>} : memref<1x4x1xf32, #tpu.memory_space<vmem>>, vector<1x4x1xf32>,
    } else {
    }
    return
  }
  func.func @transform_0(%arg0: i32, %arg1: i32) -> (i32, i32, i32) {
    %c0_i32 = arith.constant 0 : i32
    %c0_i32_0 = arith.constant 0 : i32
    return %arg0, %c0_i32, %arg1 : i32, i32, i32
  }
  func.func @transform_1(%arg0: i32, %arg1: i32) -> (i32, i32) {
    %c0_i32 = arith.constant 0 : i32
    %c0_i32_0 = arith.constant 0 : i32
    %c0_i32_1 = arith.constant 0 : i32
    return %c0_i32, %c0_i32_0 : i32, i32
  }
  func.func @transform_2(%arg0: i32, %arg1: i32) -> (i32, i32) {
    %c0_i32 = arith.constant 0 : i32
    %c0_i32_0 = arith.constant 0 : i32
    %c0_i32_1 = arith.constant 0 : i32
    return %c0_i32, %c0_i32_0 : i32, i32
  }
  func.func @transform_3(%arg0: i32, %arg1: i32) -> (i32, i32) {
    %c0_i32 = arith.constant 0 : i32
    %c0_i32_0 = arith.constant 0 : i32
    %c0_i32_1 = arith.constant 0 : i32
    return %c0_i32, %c0_i32_0 : i32, i32
  }
  func.func @transform_4(%arg0: i32, %arg1: i32) -> (i32, i32) {
    %c0_i32 = arith.constant 0 : i32
    %c0_i32_0 = arith.constant 0 : i32
    %c0_i32_1 = arith.constant 0 : i32
    return %c0_i32, %c0_i32_0 : i32, i32
  }
  func.func @transform_5(%arg0: i32, %arg1: i32) -> (i32, i32, i32) {
    %c0_i32 = arith.constant 0 : i32
    %c0_i32_0 = arith.constant 0 : i32
    %c0_i32_1 = arith.constant 0 : i32
    return %arg0, %c0_i32, %c0_i32_0 : i32, i32, i32
  }
}

module attributes {stable_mosaic.version = 11 : i64} {
  func.func @_apply_kernel(%arg0: i32, %arg1: memref<1x4x256xf32, #tpu.memory_space<vmem>>, %arg2: memref<1x4x1xf32, #tpu.memory_space<vmem>>, %arg3: memref<256x256xf32, #tpu.memory_space<vmem>>, %arg4: memref<256x256xf32, #tpu.memory_space<vmem>>, %arg5: memref<1x1xf32, #tpu.memory_space<vmem>>, %arg6: memref<1x4x256xf32, #tpu.memory_space<vmem>>) attributes {dimension_semantics = [#tpu.dimension_semantics<parallel>], iteration_bounds = array<i64: 2>, scalar_prefetch = 0 : i64, scratch_operands = 0 : i64, tpu.core_type = #tpu.core_type<tc>, window_params = [{transform_indices = @transform_0, window_bounds = array<i64: 1, 4, 256>}, {transform_indices = @transform_1, window_bounds = array<i64: 1, 4, 1>}, {pipeline_mode = #tpu.pipeline_mode<synchronous>, transform_indices = @transform_2, window_bounds = array<i64: 256, 256>}, {pipeline_mode = #tpu.pipeline_mode<synchronous>, transform_indices = @transform_3, window_bounds = array<i64: 256, 256>}, {pipeline_mode = #tpu.pipeline_mode<synchronous>, transform_indices = @transform_4, window_bounds = array<i64: 1, 1>}, {transform_indices = @transform_5, window_bounds = array<i64: 1, 4, 256>}]} {
    %c0 = arith.constant 0 : index
    %c0_0 = arith.constant 0 : index
    %c0_1 = arith.constant 0 : index
    %0 = vector.load %arg1[%c0, %c0_0, %c0_1] : memref<1x4x256xf32, #tpu.memory_space<vmem>>, vector<1x4x256xf32>
    %1 = vector.shape_cast %0 : vector<1x4x256xf32> to vector<4x256xf32>
    %c0_2 = arith.constant 0 : index
    %c0_3 = arith.constant 0 : index
    %c0_4 = arith.constant 0 : index
    %2 = vector.load %arg2[%c0_2, %c0_3, %c0_4] : memref<1x4x1xf32, #tpu.memory_space<vmem>>, vector<1x4x1xf32>
    %3 = vector.shape_cast %2 : vector<1x4x1xf32> to vector<4x1xf32>
    %4 = vector.broadcast %3 : vector<4x1xf32> to vector<4x256xf32>
    %5 = arith.mulf %1, %4 : vector<4x256xf32>
    %cst = arith.constant dense<0.000000e+00> : vector<256xf32>
    %6 = vector.multi_reduction <add>, %5, %cst [0] : vector<4x256xf32> to vector<256xf32>
    %7 = vector.shape_cast %6 : vector<256xf32> to vector<1x256xf32>
    %cst_5 = arith.constant 2.500000e-01 : f32
    %8 = vector.broadcast %cst_5 : f32 to vector<1x256xf32>
    %9 = arith.mulf %7, %8 : vector<1x256xf32>
    %cst_6 = arith.constant dense<0xFF800000> : vector<256xf32>
    %10 = vector.multi_reduction <maximumf>, %5, %cst_6 [0] : vector<4x256xf32> to vector<256xf32>
    %11 = vector.shape_cast %10 : vector<256xf32> to vector<1x256xf32>
    %c0_7 = arith.constant 0 : index
    %c0_8 = arith.constant 0 : index
    %12 = vector.load %arg3[%c0_7, %c0_8] : memref<256x256xf32, #tpu.memory_space<vmem>>, vector<256x256xf32>
    %cst_9 = arith.constant dense<0.000000e+00> : vector<1x256xf32>
    %13 = tpu.matmul %9, %12, %cst_9 {dimension_numbers = #tpu.dot_dimension_numbers<[1], [0], [0], [1], [0, 0, 1, 1], [], []>} : vector<1x256xf32>, vector<256x256xf32>, vector<1x256xf32> -> vector<1x256xf32>
    %c0_10 = arith.constant 0 : index
    %c0_11 = arith.constant 0 : index
    %14 = vector.load %arg4[%c0_10, %c0_11] : memref<256x256xf32, #tpu.memory_space<vmem>>, vector<256x256xf32>
    %cst_12 = arith.constant dense<0.000000e+00> : vector<1x256xf32>
    %15 = tpu.matmul %11, %14, %cst_12 {dimension_numbers = #tpu.dot_dimension_numbers<[1], [0], [0], [1], [0, 0, 1, 1], [], []>} : vector<1x256xf32>, vector<256x256xf32>, vector<1x256xf32> -> vector<1x256xf32>
    %16 = arith.addf %13, %15 : vector<1x256xf32>
    %c0_13 = arith.constant 0 : index
    %c0_14 = arith.constant 0 : index
    %17 = vector.load %arg5[%c0_13, %c0_14] : memref<1x1xf32, #tpu.memory_space<vmem>>, vector<1x1xf32>
    %18 = vector.broadcast %17 : vector<1x1xf32> to vector<1x256xf32>
    %19 = arith.addf %16, %18 : vector<1x256xf32>
    %20 = arith.negf %19 : vector<1x256xf32>
    %21 = math.exp %20 : vector<1x256xf32>
    %cst_15 = arith.constant 1.000000e+00 : f32
    %22 = vector.broadcast %cst_15 : f32 to vector<1x256xf32>
    %23 = arith.addf %22, %21 : vector<1x256xf32>
    %24 = arith.divf %22, %23 : vector<1x256xf32>
    %25 = vector.broadcast %24 : vector<1x256xf32> to vector<4x256xf32>
    %26 = arith.mulf %5, %25 : vector<4x256xf32>
    %27 = vector.shape_cast %26 : vector<4x256xf32> to vector<1x4x256xf32>
    %c0_16 = arith.constant 0 : index
    %c0_17 = arith.constant 0 : index
    %c0_18 = arith.constant 0 : index
    %28 = vector.load %arg6[%c0_16, %c0_17, %c0_18] : memref<1x4x256xf32, #tpu.memory_space<vmem>>, vector<1x4x256xf32>
    tpu.vector_store %arg6[%c0_16, %c0_17, %c0_18], %27 {strides = array<i32>} : memref<1x4x256xf32, #tpu.memory_space<vmem>>, vector<1x4x256xf32>,
    return
  }
  func.func @transform_0(%arg0: i32) -> (i32, i32, i32) {
    %c0_i32 = arith.constant 0 : i32
    %c0_i32_0 = arith.constant 0 : i32
    %c0_i32_1 = arith.constant 0 : i32
    return %arg0, %c0_i32, %c0_i32_0 : i32, i32, i32
  }
  func.func @transform_1(%arg0: i32) -> (i32, i32, i32) {
    %c0_i32 = arith.constant 0 : i32
    %c0_i32_0 = arith.constant 0 : i32
    %c0_i32_1 = arith.constant 0 : i32
    return %arg0, %c0_i32, %c0_i32_0 : i32, i32, i32
  }
  func.func @transform_2(%arg0: i32) -> (i32, i32) {
    %c0_i32 = arith.constant 0 : i32
    %c0_i32_0 = arith.constant 0 : i32
    %c0_i32_1 = arith.constant 0 : i32
    return %c0_i32, %c0_i32_0 : i32, i32
  }
  func.func @transform_3(%arg0: i32) -> (i32, i32) {
    %c0_i32 = arith.constant 0 : i32
    %c0_i32_0 = arith.constant 0 : i32
    %c0_i32_1 = arith.constant 0 : i32
    return %c0_i32, %c0_i32_0 : i32, i32
  }
  func.func @transform_4(%arg0: i32) -> (i32, i32) {
    %c0_i32 = arith.constant 0 : i32
    %c0_i32_0 = arith.constant 0 : i32
    %c0_i32_1 = arith.constant 0 : i32
    return %c0_i32, %c0_i32_0 : i32, i32
  }
  func.func @transform_5(%arg0: i32) -> (i32, i32, i32) {
    %c0_i32 = arith.constant 0 : i32
    %c0_i32_0 = arith.constant 0 : i32
    %c0_i32_1 = arith.constant 0 : i32
    return %arg0, %c0_i32, %c0_i32_0 : i32, i32, i32
  }
}

</mosaic_0001>

<llo_original>
// kernel: cbam_forward.2
$region0: #{cbam_forward.2}
  #allocation0 [shape = 'u32[]', space=smem, size = 0x4, offset = 0x4, fixed_abs, tag = 'smem constant byte address 0x4 - core index']
  #allocation1 [shape = 'u32[72,128]{1,0:T(1,128)}', space=vmem, size = 0x9000, scoped, tag = 'internal scratch']
  #allocation2 [shape = 'f32[4,1]{1,0:T(4,128)}', space=vmem, size = 0x800, scoped, tag = 'scratch operand']
  #allocation3 [shape = 'f32[4,1]{1,0:T(4,128)}', space=vmem, size = 0x800, scoped, tag = 'scratch operand']
  %s0 = inlined_call_operand.vmem [shape: f32[2,4,256], index: 0, kind: input, shape index: {}]
  %s1 = inlined_call_operand.vmem [shape: f32[2,4], index: 1, kind: input, shape index: {}]
  %s2 = inlined_call_operand.vmem [shape: f32[2,1], index: 2, kind: input, shape index: {}]
  %s3 = inlined_call_operand.vmem [shape: f32[4,2], index: 3, kind: input, shape index: {}]
  %s4 = inlined_call_operand.vmem [shape: f32[4,1], index: 4, kind: input, shape index: {}]
  %s5 = inlined_call_operand.vmem [shape: f32[2,4,1], index: 5, kind: output, shape index: {}]
  %s6 = sld [smem:[#allocation0]]
  $region61: #{cbam_forward.2} parent=0
    _
  %s8 = ssub.s32 1, %s6
  %s9 = scalar_select 0, %s8, %s6
  loop: start=0, step=1, limit=4
  $region2: #{cbam_forward.2} parent=0 // loop_pre_header
    _
  $region3: #{cbam_forward.2} parent=0 // loop_header
    %s11 = sphi 0, %s15
    %p12 = scmp.ge.s32.totalorder %s11, 4
    %s18 = sphi 0, %s30
    %s19 = sphi 0, %s26
    %s20 = sphi 0, %s18
    %s21 = sphi 0, %s19
    %s22 = sphi 0, %s20
    %s23 = sphi 0, %s21
    %s35 = sphi 0, %s37
    %s38 = sphi 0, %s35
    %s39 = sphi 0, %s38
    %s55 = sphi 0, %s39
    %s59 = sphi 0, %s59
    %s61 = sphi 0, %s59
    %s62 = sphi 0, %s61
    %s76 = sphi 0, %s62
    %s80 = sphi 0, %s80
    %s82 = sphi 0, %s80
    %s83 = sphi 0, %s82
    %s97 = sphi 0, %s83
    %s101 = sphi 0, %s101
    %s103 = sphi 0, %s101
    %s104 = sphi 0, %s103
    %s118 = sphi 0, %s104
    %s122 = sphi 0, %s122
    %s124 = sphi 0, %s122
    %s125 = sphi 0, %s124
    %s139 = sphi 0, %s125
    %s145 = sphi 0, %s147
    %s148 = sphi 0, %s145
    %s149 = sphi 0, %s148
    %s165 = sphi 0, %s149
  $region4: #{cbam_forward.2} parent=0 // loop_header_branch
    %14 = sbr.rel (%p12) target = $region8
  $region5: #{cbam_forward.2} parent=0 // loop_body
    %s16 = ssub.s32 %s11, 1
    %s17 = ssub.s32 %s11, 2
    %s24 = sadd.s32 1, %s19
    %p25 = scmp.ge.s32.totalorder %s24, 1
    %s26 = scalar_select %p25, 0, %s24
    %s27 = sadd.s32 1, %s18
    %s28 = scalar_select %p25, %s27, %s18
    %p29 = scmp.ge.s32.totalorder %s28, 2
    %s30 = scalar_select %p29, 0, %s28
    %s31 = ssub.s32 %s18, %s30
    %s32 = ssub.s32 %s19, %s26
    %s33 = sor.u32 %s31, %s32
    %p34 = scmp.eq.s32.totalorder %s33, 0
    %s36 = sadd.s32 %s35, 1
    %s37 = scalar_select %p34, %s35, %s36
    %p40 = pneg %p34
    %p41 = scmp.eq.s32.totalorder %s11, 1
    %p42 = por %p40, %p41
    %p43 = scmp.ne.s32.totalorder %s35, %s38
    %p44 = scmp.eq.s32.totalorder %s11, 0
    %p45 = por %p43, %p44
    %p46 = scmp.ne.s32.totalorder %s35, %s38
    %p47 = scmp.eq.s32.totalorder %s16, 1
    %p48 = por %p46, %p47
    %p49 = scmp.ne.s32.totalorder %s38, %s39
    %p50 = scmp.eq.s32.totalorder %s16, 0
    %p51 = por %p49, %p50
    %p52 = scmp.ne.s32.totalorder %s38, %s39
    %p53 = scmp.eq.s32.totalorder %s17, 1
    %p54 = por %p52, %p53
    %p56 = scmp.ne.s32.totalorder %s39, %s55
    %p57 = scmp.eq.s32.totalorder %s17, 0
    %p58 = por %p56, %p57
    %s60 = sadd.s32 %s59, 1
    %p63 = scmp.eq.s32.totalorder %s11, 1
    %p64 = scmp.ne.s32.totalorder %s59, %s61
    %p65 = scmp.eq.s32.totalorder %s11, 0
    %p66 = por %p64, %p65
    %p67 = scmp.ne.s32.totalorder %s59, %s61
    %p68 = scmp.eq.s32.totalorder %s16, 1
    %p69 = por %p67, %p68
    %p70 = scmp.ne.s32.totalorder %s61, %s62
    %p71 = scmp.eq.s32.totalorder %s16, 0
    %p72 = por %p70, %p71
    %p73 = scmp.ne.s32.totalorder %s61, %s62
    %p74 = scmp.eq.s32.totalorder %s17, 1
    %p75 = por %p73, %p74
    %p77 = scmp.ne.s32.totalorder %s62, %s76
    %p78 = scmp.eq.s32.totalorder %s17, 0
    %p79 = por %p77, %p78
    %s81 = sadd.s32 %s80, 1
    %p84 = scmp.eq.s32.totalorder %s11, 1
    %p85 = scmp.ne.s32.totalorder %s80, %s82
    %p86 = scmp.eq.s32.totalorder %s11, 0
    %p87 = por %p85, %p86
    %p88 = scmp.ne.s32.totalorder %s80, %s82
    %p89 = scmp.eq.s32.totalorder %s16, 1
    %p90 = por %p88, %p89
    %p91 = scmp.ne.s32.totalorder %s82, %s83
    %p92 = scmp.eq.s32.totalorder %s16, 0
    %p93 = por %p91, %p92
    %p94 = scmp.ne.s32.totalorder %s82, %s83
    %p95 = scmp.eq.s32.totalorder %s17, 1
    %p96 = por %p94, %p95
    %p98 = scmp.ne.s32.totalorder %s83, %s97
    %p99 = scmp.eq.s32.totalorder %s17, 0
    %p100 = por %p98, %p99
    %s102 = sadd.s32 %s101, 1
    %p105 = scmp.eq.s32.totalorder %s11, 1
    %p106 = scmp.ne.s32.totalorder %s101, %s103
    %p107 = scmp.eq.s32.totalorder %s11, 0
    %p108 = por %p106, %p107
    %p109 = scmp.ne.s32.totalorder %s101, %s103
    %p110 = scmp.eq.s32.totalorder %s16, 1
    %p111 = por %p109, %p110
    %p112 = scmp.ne.s32.totalorder %s103, %s104
    %p113 = scmp.eq.s32.totalorder %s16, 0
    %p114 = por %p112, %p113
    %p115 = scmp.ne.s32.totalorder %s103, %s104
    %p116 = scmp.eq.s32.totalorder %s17, 1
    %p117 = por %p115, %p116
    %p119 = scmp.ne.s32.totalorder %s104, %s118
    %p120 = scmp.eq.s32.totalorder %s17, 0
    %p121 = por %p119, %p120
    %s123 = sadd.s32 %s122, 1
    %p126 = scmp.eq.s32.totalorder %s11, 1
    %p127 = scmp.ne.s32.totalorder %s122, %s124
    %p128 = scmp.eq.s32.totalorder %s11, 0
    %p129 = por %p127, %p128
    %p130 = scmp.ne.s32.totalorder %s122, %s124
    %p131 = scmp.eq.s32.totalorder %s16, 1
    %p132 = por %p130, %p131
    %p133 = scmp.ne.s32.totalorder %s124, %s125
    %p134 = scmp.eq.s32.totalorder %s16, 0
    %p135 = por %p133, %p134
    %p136 = scmp.ne.s32.totalorder %s124, %s125
    %p137 = scmp.eq.s32.totalorder %s17, 1
    %p138 = por %p136, %p137
    %p140 = scmp.ne.s32.totalorder %s125, %s139
    %p141 = scmp.eq.s32.totalorder %s17, 0
    %p142 = por %p140, %p141
    %s143 = ssub.s32 %s18, %s30
    %p144 = scmp.eq.s32.totalorder %s143, 0
    %s146 = sadd.s32 %s145, 1
    %s147 = scalar_select %p144, %s145, %s146
    %p150 = pneg %p144
    %p151 = scmp.eq.s32.totalorder %s11, 1
    %p152 = por %p150, %p151
    %p153 = scmp.ne.s32.totalorder %s145, %s148
    %p154 = scmp.eq.s32.totalorder %s11, 0
    %p155 = por %p153, %p154
    %p156 = scmp.ne.s32.totalorder %s145, %s148
    %p157 = scmp.eq.s32.totalorder %s16, 1
    %p158 = por %p156, %p157
    %p159 = scmp.ne.s32.totalorder %s148, %s149
    %p160 = scmp.eq.s32.totalorder %s16, 0
    %p161 = por %p159, %p160
    %p162 = scmp.ne.s32.totalorder %s148, %s149
    %p163 = scmp.eq.s32.totalorder %s17, 1
    %p164 = por %p162, %p163
    %p166 = scmp.ne.s32.totalorder %s149, %s165
    %p167 = scmp.eq.s32.totalorder %s17, 0
    %p168 = por %p166, %p167
    %p169 = scmp.le.s32.totalorder 1, %s11
    %p170 = scmp.lt.s32.totalorder %s11, 3
    %p171 = pnand %p169, %p170
    %p172 = pneg %p171
    // Predicated region
    $region9: #{cbam_forward.2} parent=5 // pred_check
      _
    $region10: #{cbam_forward.2} parent=5 // pred_check_branch
      %174 = sbr.rel (%p171) target = $region12
    $region11: #{cbam_forward.2} parent=5 // pred_region
      %s175 = ssub.s32 %s11, 1
      // Predicated region
      $region13: #{cbam_forward.2} parent=11 // pred_check
        %p176 = pneg %p72
      $region14: #{cbam_forward.2} parent=11 // pred_check_branch
        %178 = sbr.rel (%p176) target = $region16
      $region15: #{cbam_forward.2} parent=11 // pred_region
        _
      $region16: #{cbam_forward.2} parent=11 // pred_fallthru
        _
      // Predicated region
      $region17: #{cbam_forward.2} parent=11 // pred_check
        %p179 = pneg %p93
      $region18: #{cbam_forward.2} parent=11 // pred_check_branch
        %181 = sbr.rel (%p179) target = $region20
      $region19: #{cbam_forward.2} parent=11 // pred_region
        _
      $region20: #{cbam_forward.2} parent=11 // pred_fallthru
        _
      // Predicated region
      $region21: #{cbam_forward.2} parent=11 // pred_check
        %p182 = pneg %p114
      $region22: #{cbam_forward.2} parent=11 // pred_check_branch
        %184 = sbr.rel (%p182) target = $region24
      $region23: #{cbam_forward.2} parent=11 // pred_region
        _
      $region24: #{cbam_forward.2} parent=11 // pred_fallthru
        _
      // Predicated region
      $region25: #{cbam_forward.2} parent=11 // pred_check
        %p185 = pneg %p135
      $region26: #{cbam_forward.2} parent=11 // pred_check_branch
        %187 = sbr.rel (%p185) target = $region28
      $region27: #{cbam_forward.2} parent=11 // pred_region
        _
      $region28: #{cbam_forward.2} parent=11 // pred_fallthru
        _
    $region12: #{cbam_forward.2} parent=5 // pred_fallthru
      _
    %p188 = scmp.lt.s32.totalorder %s11, 2
    // Predicated region
    $region29: #{cbam_forward.2} parent=5 // pred_check
      %p189 = pneg %p188
    $region30: #{cbam_forward.2} parent=5 // pred_check_branch
      %191 = sbr.rel (%p189) target = $region32
    $region31: #{cbam_forward.2} parent=5 // pred_region
      // Predicated region
      $region33: #{cbam_forward.2} parent=31 // pred_check
        %p192 = pneg %p45
      $region34: #{cbam_forward.2} parent=31 // pred_check_branch
        %194 = sbr.rel (%p192) target = $region36
      $region35: #{cbam_forward.2} parent=31 // pred_region
        %s195 = smul.u32 2, %s19
        %p196 = scmp.lt.s32.totalorder %s18, 1
        %s197 = scalar_select %p196, %s18, 1
        %p198 = scmp.lt.s32.totalorder %s195, 1
        %s199 = scalar_select %p198, %s195, 1
        %s200 = smul.addr %s197, 2
        %s201 = sadd.s32 %s199, %s200
        %s202 = smul.addr %s201, 4
        %s203 = scalar_lea.vmem %s0, %s202
        %s204 = smul.u32 2, %s19
      $region36: #{cbam_forward.2} parent=31 // pred_fallthru
        _
    $region32: #{cbam_forward.2} parent=5 // pred_fallthru
      _
    %p205 = scmp.le.s32.totalorder 1, %s11
    %p206 = scmp.lt.s32.totalorder %s11, 3
    %p207 = pnand %p205, %p206
    %p208 = pneg %p207
    // Predicated region
    $region37: #{cbam_forward.2} parent=5 // pred_check
      _
    $region38: #{cbam_forward.2} parent=5 // pred_check_branch
      %210 = sbr.rel (%p207) target = $region40
    $region39: #{cbam_forward.2} parent=5 // pred_region
      %s211 = ssub.s32 %s11, 1
      %s212 = smul.u32 2, %s21
      %p213 = scmp.lt.s32.totalorder %s20, 1
      %s214 = scalar_select %p213, %s20, 1
      %p215 = scmp.lt.s32.totalorder %s212, 1
      %s216 = scalar_select %p215, %s212, 1
      %s217 = smul.addr %s214, 2
      %s218 = sadd.s32 %s216, %s217
      %s219 = smul.addr %s218, 4
      %s220 = scalar_lea.vmem %s0, %s219
      %p221 = pneg %p51
      %p222 = pneg %p48
      %p223 = pneg %p72
      %p224 = pneg %p69
      %p225 = pneg %p93
      %p226 = pneg %p90
      %p227 = pneg %p114
      %p228 = pneg %p111
      %p229 = pneg %p135
      %p230 = pneg %p132
      %p231 = pneg %p161
      %p232 = pneg %p158
      %p233 = scmp.lt.s32.totalorder %s20, 1
      %s234 = scalar_select %p233, %s20, 1
      %s235 = smul.addr %s234, 4
      %s236 = scalar_lea.vmem %s5, %s235
      %s237 = smul.u32 2, %s21
      %p238 = scmp.lt.s32.totalorder %s20, 1
      %s239 = scalar_select %p238, %s20, 1
      %p240 = scmp.lt.s32.totalorder %s237, 1
      %s241 = scalar_select %p240, %s237, 1
      %s242 = smul.addr %s239, 2
      %s243 = sadd.s32 %s241, %s242
      %s244 = smul.addr %s243, 4
      %s245 = scalar_lea.vmem %s0, %s244
      %s246 = smul.u32 2, %s21
      %p247 = scmp.lt.s32.totalorder %s20, 1
      %s248 = scalar_select %p247, %s20, 1
      %s249 = smul.addr %s248, 4
      %s250 = scalar_lea.vmem %s5, %s249
      %p251 = scmp.eq.s32.totalorder %s21, 0
      // Predicated region
      $region41: #{cbam_forward.2} parent=39 // pred_check
        %p252 = pneg %p251
      $region42: #{cbam_forward.2} parent=39 // pred_check_branch
        %254 = sbr.rel (%p252) target = $region44
      $region43: #{cbam_forward.2} parent=39 // pred_region
        %vm255 = vcmask 3072
        %256 = vst.msk [vmem:[#allocation2] sm:$0xf] %vm255, 0.0
        %257 = vst.msk [vmem:[#allocation3] sm:$0xf] %vm255, -inf
      $region44: #{cbam_forward.2} parent=39 // pred_fallthru
        _
      %v258 = vld [vmem:[%s245] sm:$0xff]
      %v259 = vld [vmem:[#allocation2] sm:$0xf]
      %261 = vst [vmem:[#allocation1] ss:$2 sm:$0xff] %v258
      %v262 = vld.sshfl [vmem:[#allocation1] sm:$0xff pattern:$0x75316420]
      %v263 = vld.sshfl [vmem:[#allocation1 + $0x8] sm:$0xff pattern:$0x75316420]
      %vm266 = vcmask 1043456
      %v267 = vsel %vm266, %v262, 0.0
      %v268 = vsel %vm266, %v263, 0.0
      %v269 = vadd.f32 %v267, %v268
      %270 = vadd.xlane.f32.xlu0 %v269
      %v271 = vpop.xlane.xlu0 %270
      %v272 = vadd.f32 %v259, %v271
      %vm273 = vcmask 3072
      %274 = vst.msk [vmem:[#allocation2] sm:$0xf] %vm273, %v272
      %v275 = vld [vmem:[#allocation3] sm:$0xf]
      %276 = vst [vmem:[#allocation1] ss:$2 sm:$0xff] %v258
      %v277 = vld.sshfl [vmem:[#allocation1] sm:$0xff pattern:$0x75316420]
      %v278 = vld.sshfl [vmem:[#allocation1 + $0x8] sm:$0xff pattern:$0x75316420]
      %v281 = vsel %vm266, %v277, -inf
      %v282 = vsel %vm266, %v278, -inf
      %v283 = vmax.f32 %v281, %v282
      %284 = vmax.xlane.f32.xlu0 %v283
      %v285 = vpop.xlane.xlu0 %284
      %v286 = vmax.f32 %v275, %v285
      %287 = vst.msk [vmem:[#allocation3] sm:$0xf] %vm273, %v286
      // Predicated region
      $region45: #{cbam_forward.2} parent=39 // pred_check
        %p288 = pneg %p251
      $region46: #{cbam_forward.2} parent=39 // pred_check_branch
        %290 = sbr.rel (%p288) target = $region48
      $region47: #{cbam_forward.2} parent=39 // pred_region
        %v291 = vld [vmem:[#allocation2] sm:$0xf]
        %v292 = vmul.f32 %v291, 0.00390625
        %v293 = vld [vmem:[#allocation3] sm:$0xf]
        %v294 = vld [vmem:[%s1] sm:$0x3]
        %v295 = vld [vmem:[%s2] sm:$0x3]
        %vm296 = vcmask 31744
        %v298 = vsel %vm296, %v294, 0
        %v301 = vsel %vm266, %v292, 0
        %303 = vmatpush.msra.mxu0 0.0
        %304 = vmatpush.msra.mxu0 0.0
        %305 = vmatpush.msra.mxu0 0.0
        %306 = vmatpush.msra.mxu0 0.0
        %307 = vmatpush.msra.mxu0 0.0
        %308 = vmatpush.msra.mxu0 0.0
        %309 = vmatpush.msra.mxu0 0.0
        %310 = vmatpush.msra.mxu0 0.0
        %311 = vmatpush.msra.mxu0 0.0
        %312 = vmatpush.msra.mxu0 0.0
        %313 = vmatpush.msra.mxu0 0.0
        %314 = vmatpush.msra.mxu0 0.0
        %315 = vmatpush.msra.mxu0 0.0
        %316 = vmatpush.msra.mxu0 0.0
        %317 = vmatpush.msra.mxu0 0.0
        %318 = vmatpush.msra.mxu0 %v301
        %319 = vmatmul.f32.gmra.mxu0 %v298
        %v320 = vpop.f32.mrf.mxu0
        %v321 = vadd.f32 %v295, %v320
        %322 = vdwg.mxu0
        %v323 = vmax.f32 %v321, 0.0
        %v325 = vsel %vm266, %v293, 0
        %327 = vmatpush.msra.mxu0 0.0
        %328 = vmatpush.msra.mxu0 0.0
        %329 = vmatpush.msra.mxu0 0.0
        %330 = vmatpush.msra.mxu0 0.0
        %331 = vmatpush.msra.mxu0 0.0
        %332 = vmatpush.msra.mxu0 0.0
        %333 = vmatpush.msra.mxu0 0.0
        %334 = vmatpush.msra.mxu0 0.0
        %335 = vmatpush.msra.mxu0 0.0
        %336 = vmatpush.msra.mxu0 0.0
        %337 = vmatpush.msra.mxu0 0.0
        %338 = vmatpush.msra.mxu0 0.0
        %339 = vmatpush.msra.mxu0 0.0
        %340 = vmatpush.msra.mxu0 0.0
        %341 = vmatpush.msra.mxu0 0.0
        %342 = vmatpush.msra.mxu0 %v325
        %343 = vmatmul.f32.gmra.mxu0 %v298
        %v344 = vpop.f32.mrf.mxu0
        %v345 = vadd.f32 %v295, %v344
        %346 = vdwg.mxu0
        %v347 = vmax.f32 %v345, 0.0
        %v348 = vadd.f32 %v323, %v347
        %v349 = vld [vmem:[%s3] sm:$0xf]
        %v350 = vld [vmem:[%s4] sm:$0xf]
        %v351 = vmul.f32 %v350, 2.0
        %vm352 = vcmask 15360
        %v354 = vsel %vm352, %v349, 0
        %vm356 = vcmask 1041408
        %v358 = vsel %vm356, %v348, 0
        %360 = vmatpush.msra.mxu0 0.0
        %361 = vmatpush.msra.mxu0 0.0
        %362 = vmatpush.msra.mxu0 0.0
        %363 = vmatpush.msra.mxu0 0.0
        %364 = vmatpush.msra.mxu0 0.0
        %365 = vmatpush.msra.mxu0 0.0
        %366 = vmatpush.msra.mxu0 0.0
        %367 = vmatpush.msra.mxu0 0.0
        %368 = vmatpush.msra.mxu0 0.0
        %369 = vmatpush.msra.mxu0 0.0
        %370 = vmatpush.msra.mxu0 0.0
        %371 = vmatpush.msra.mxu0 0.0
        %372 = vmatpush.msra.mxu0 0.0
        %373 = vmatpush.msra.mxu0 0.0
        %374 = vmatpush.msra.mxu0 0.0
        %375 = vmatpush.msra.mxu0 %v358
        %376 = vmatmul.f32.gmra.mxu0 %v354
        %v377 = vpop.f32.mrf.mxu0
        %v378 = vadd.f32 %v351, %v377
        %379 = vdwg.mxu0
        %v380 = vxor.u32 %v378, 2147483648
        %v381 = vmul.f32 %v380, 1.442695
        %v382 = vpow.pop %v381
        %v383 = vadd.f32 %v382, 1.0
        %v384 = vrcp.pop %v383
        %v385 = vmul.f32 %v383, %v384
        %v386 = vsub.f32 1.0, %v385
        %v387 = vmul.f32 %v384, %v386
        %v388 = vadd.f32 %v384, %v387
        %vm389 = vweird.f32 %v383
        %vm390 = vweird.f32 %v384
        %vm391 = vmor %vm389, %vm390
        %v392 = vsel %vm391, %v384, %v388
        %v393 = vand.u32 2147483647, %v383
        %vm394 = vcmp.eq.f32.partialorder %v393, 8.507059e+37
        %v395 = vand.u32 %v383, 2147483648
        %v396 = vor.u32 1.1754944e-38, %v395
        %v397 = vsel %vm394, %v396, %v392
        %v398 = vmul.f32 1.0, %v397
        %399 = vst.msk [vmem:[%s250] sm:$0xf] %vm273, %v398
      $region48: #{cbam_forward.2} parent=39 // pred_fallthru
        _
      %p400 = scmp.lt.s32.totalorder %s20, 1
      %s401 = scalar_select %p400, %s20, 1
      %s402 = smul.addr %s401, 4
      %s403 = scalar_lea.vmem %s5, %s402
      // Predicated region
      $region49: #{cbam_forward.2} parent=39 // pred_check
        %p404 = pneg %p158
      $region50: #{cbam_forward.2} parent=39 // pred_check_branch
        %406 = sbr.rel (%p404) target = $region52
      $region51: #{cbam_forward.2} parent=39 // pred_region
        _
      $region52: #{cbam_forward.2} parent=39 // pred_fallthru
        _
    $region40: #{cbam_forward.2} parent=5 // pred_fallthru
      _
    %p407 = scmp.le.s32.totalorder 2, %s11
    // Predicated region
    $region53: #{cbam_forward.2} parent=5 // pred_check
      %p408 = pneg %p407
    $region54: #{cbam_forward.2} parent=5 // pred_check_branch
      %410 = sbr.rel (%p408) target = $region56
    $region55: #{cbam_forward.2} parent=5 // pred_region
      %s411 = ssub.s32 %s11, 2
      // Predicated region
      $region57: #{cbam_forward.2} parent=55 // pred_check
        %p412 = pneg %p164
      $region58: #{cbam_forward.2} parent=55 // pred_check_branch
        %414 = sbr.rel (%p412) target = $region60
      $region59: #{cbam_forward.2} parent=55 // pred_region
        %p415 = scmp.lt.s32.totalorder %s22, 1
        %s416 = scalar_select %p415, %s22, 1
        %s417 = smul.addr %s416, 4
        %s418 = scalar_lea.vmem %s5, %s417
      $region60: #{cbam_forward.2} parent=55 // pred_fallthru
        _
    $region56: #{cbam_forward.2} parent=5 // pred_fallthru
      _
  $region6: #{cbam_forward.2} parent=0 // loop_footer
    %s15 = sadd.s32 1, %s11
  $region7: #{cbam_forward.2} parent=0 // loop_footer_branch
    %10 = sbr.rel target = $region3
  $region8: #{cbam_forward.2} parent=0 // loop_exit
    _

// kernel: cbam_forward.3
$region0: #{cbam_forward.3}
  #allocation0 [shape = 'u32[]', space=smem, size = 0x4, offset = 0x4, fixed_abs, tag = 'smem constant byte address 0x4 - core index']
  #allocation1 [shape = 'u32[72,128]{1,0:T(1,128)}', space=vmem, size = 0x9000, scoped, tag = 'internal scratch']
  #allocation2 [shape = 'f32[1,1]{1,0:T(1,128)S(1)}', space=vmem, size = 0x200, scoped, tag = 'scoped memory for cbam_forward.3']
  %s0 = inlined_call_operand.vmem [shape: f32[2,4,256], index: 0, kind: input, shape index: {}]
  %s1 = inlined_call_operand.vmem [shape: f32[2,4,1], index: 1, kind: input, shape index: {}]
  %s2 = inlined_call_operand.vmem [shape: f32[256,256], index: 2, kind: input, shape index: {}]
  %s3 = inlined_call_operand.vmem [shape: f32[256,256], index: 3, kind: input, shape index: {}]
  %s4 = inlined_call_operand.<no memory space> [shape: f32[1,1], index: 4, kind: input, shape index: {}]
  %s5 = inlined_call_operand.vmem [shape: f32[2,4,256], index: 5, kind: output, shape index: {}]
  %s6 = sld [smem:[#allocation0]]
  $region53: #{cbam_forward.3} parent=0
    _
  %s8 = ssub.s32 1, %s6
  %s9 = scalar_select 0, %s8, %s6
  %v10 = vstv %s4
  %11 = vst [vmem:[#allocation2] sm:$0x1] %v10
  loop: start=0, step=1, limit=4
  $region2: #{cbam_forward.3} parent=0 // loop_pre_header
    _
  $region3: #{cbam_forward.3} parent=0 // loop_header
    %s13 = sphi 0, %s17
    %p14 = scmp.ge.s32.totalorder %s13, 4
    %s23 = sphi 0, %s25
    %s26 = sphi 0, %s23
    %s27 = sphi 0, %s26
    %s43 = sphi 0, %s27
    %s49 = sphi 0, %s51
    %s52 = sphi 0, %s49
    %s53 = sphi 0, %s52
    %s69 = sphi 0, %s53
    %s73 = sphi 0, %s73
    %s75 = sphi 0, %s73
    %s76 = sphi 0, %s75
    %s90 = sphi 0, %s76
    %s94 = sphi 0, %s94
    %s96 = sphi 0, %s94
    %s97 = sphi 0, %s96
    %s111 = sphi 0, %s97
    %s115 = sphi 0, %s115
    %s117 = sphi 0, %s115
    %s118 = sphi 0, %s117
    %s132 = sphi 0, %s118
    %s138 = sphi 0, %s140
    %s141 = sphi 0, %s138
    %s142 = sphi 0, %s141
    %s158 = sphi 0, %s142
  $region4: #{cbam_forward.3} parent=0 // loop_header_branch
    %16 = sbr.rel (%p14) target = $region8
  $region5: #{cbam_forward.3} parent=0 // loop_body
    %s18 = ssub.s32 %s13, 1
    %s19 = ssub.s32 %s13, 2
    %s20 = sadd.s32 %s13, 1
    %s21 = ssub.s32 %s13, %s20
    %p22 = scmp.eq.s32.totalorder %s21, 0
    %s24 = sadd.s32 %s23, 1
    %s25 = scalar_select %p22, %s23, %s24
    %p28 = pneg %p22
    %p29 = scmp.eq.s32.totalorder %s13, 1
    %p30 = por %p28, %p29
    %p31 = scmp.ne.s32.totalorder %s23, %s26
    %p32 = scmp.eq.s32.totalorder %s13, 0
    %p33 = por %p31, %p32
    %p34 = scmp.ne.s32.totalorder %s23, %s26
    %p35 = scmp.eq.s32.totalorder %s18, 1
    %p36 = por %p34, %p35
    %p37 = scmp.ne.s32.totalorder %s26, %s27
    %p38 = scmp.eq.s32.totalorder %s18, 0
    %p39 = por %p37, %p38
    %p40 = scmp.ne.s32.totalorder %s26, %s27
    %p41 = scmp.eq.s32.totalorder %s19, 1
    %p42 = por %p40, %p41
    %p44 = scmp.ne.s32.totalorder %s27, %s43
    %p45 = scmp.eq.s32.totalorder %s19, 0
    %p46 = por %p44, %p45
    %s47 = ssub.s32 %s13, %s20
    %p48 = scmp.eq.s32.totalorder %s47, 0
    %s50 = sadd.s32 %s49, 1
    %s51 = scalar_select %p48, %s49, %s50
    %p54 = pneg %p48
    %p55 = scmp.eq.s32.totalorder %s13, 1
    %p56 = por %p54, %p55
    %p57 = scmp.ne.s32.totalorder %s49, %s52
    %p58 = scmp.eq.s32.totalorder %s13, 0
    %p59 = por %p57, %p58
    %p60 = scmp.ne.s32.totalorder %s49, %s52
    %p61 = scmp.eq.s32.totalorder %s18, 1
    %p62 = por %p60, %p61
    %p63 = scmp.ne.s32.totalorder %s52, %s53
    %p64 = scmp.eq.s32.totalorder %s18, 0
    %p65 = por %p63, %p64
    %p66 = scmp.ne.s32.totalorder %s52, %s53
    %p67 = scmp.eq.s32.totalorder %s19, 1
    %p68 = por %p66, %p67
    %p70 = scmp.ne.s32.totalorder %s53, %s69
    %p71 = scmp.eq.s32.totalorder %s19, 0
    %p72 = por %p70, %p71
    %s74 = sadd.s32 %s73, 1
    %p77 = scmp.eq.s32.totalorder %s13, 1
    %p78 = scmp.ne.s32.totalorder %s73, %s75
    %p79 = scmp.eq.s32.totalorder %s13, 0
    %p80 = por %p78, %p79
    %p81 = scmp.ne.s32.totalorder %s73, %s75
    %p82 = scmp.eq.s32.totalorder %s18, 1
    %p83 = por %p81, %p82
    %p84 = scmp.ne.s32.totalorder %s75, %s76
    %p85 = scmp.eq.s32.totalorder %s18, 0
    %p86 = por %p84, %p85
    %p87 = scmp.ne.s32.totalorder %s75, %s76
    %p88 = scmp.eq.s32.totalorder %s19, 1
    %p89 = por %p87, %p88
    %p91 = scmp.ne.s32.totalorder %s76, %s90
    %p92 = scmp.eq.s32.totalorder %s19, 0
    %p93 = por %p91, %p92
    %s95 = sadd.s32 %s94, 1
    %p98 = scmp.eq.s32.totalorder %s13, 1
    %p99 = scmp.ne.s32.totalorder %s94, %s96
    %p100 = scmp.eq.s32.totalorder %s13, 0
    %p101 = por %p99, %p100
    %p102 = scmp.ne.s32.totalorder %s94, %s96
    %p103 = scmp.eq.s32.totalorder %s18, 1
    %p104 = por %p102, %p103
    %p105 = scmp.ne.s32.totalorder %s96, %s97
    %p106 = scmp.eq.s32.totalorder %s18, 0
    %p107 = por %p105, %p106
    %p108 = scmp.ne.s32.totalorder %s96, %s97
    %p109 = scmp.eq.s32.totalorder %s19, 1
    %p110 = por %p108, %p109
    %p112 = scmp.ne.s32.totalorder %s97, %s111
    %p113 = scmp.eq.s32.totalorder %s19, 0
    %p114 = por %p112, %p113
    %s116 = sadd.s32 %s115, 1
    %p119 = scmp.eq.s32.totalorder %s13, 1
    %p120 = scmp.ne.s32.totalorder %s115, %s117
    %p121 = scmp.eq.s32.totalorder %s13, 0
    %p122 = por %p120, %p121
    %p123 = scmp.ne.s32.totalorder %s115, %s117
    %p124 = scmp.eq.s32.totalorder %s18, 1
    %p125 = por %p123, %p124
    %p126 = scmp.ne.s32.totalorder %s117, %s118
    %p127 = scmp.eq.s32.totalorder %s18, 0
    %p128 = por %p126, %p127
    %p129 = scmp.ne.s32.totalorder %s117, %s118
    %p130 = scmp.eq.s32.totalorder %s19, 1
    %p131 = por %p129, %p130
    %p133 = scmp.ne.s32.totalorder %s118, %s132
    %p134 = scmp.eq.s32.totalorder %s19, 0
    %p135 = por %p133, %p134
    %s136 = ssub.s32 %s13, %s20
    %p137 = scmp.eq.s32.totalorder %s136, 0
    %s139 = sadd.s32 %s138, 1
    %s140 = scalar_select %p137, %s138, %s139
    %p143 = pneg %p137
    %p144 = scmp.eq.s32.totalorder %s13, 1
    %p145 = por %p143, %p144
    %p146 = scmp.ne.s32.totalorder %s138, %s141
    %p147 = scmp.eq.s32.totalorder %s13, 0
    %p148 = por %p146, %p147
    %p149 = scmp.ne.s32.totalorder %s138, %s141
    %p150 = scmp.eq.s32.totalorder %s18, 1
    %p151 = por %p149, %p150
    %p152 = scmp.ne.s32.totalorder %s141, %s142
    %p153 = scmp.eq.s32.totalorder %s18, 0
    %p154 = por %p152, %p153
    %p155 = scmp.ne.s32.totalorder %s141, %s142
    %p156 = scmp.eq.s32.totalorder %s19, 1
    %p157 = por %p155, %p156
    %p159 = scmp.ne.s32.totalorder %s142, %s158
    %p160 = scmp.eq.s32.totalorder %s19, 0
    %p161 = por %p159, %p160
    %p162 = scmp.le.s32.totalorder 1, %s13
    %p163 = scmp.lt.s32.totalorder %s13, 3
    %p164 = pnand %p162, %p163
    %p165 = pneg %p164
    // Predicated region
    $region9: #{cbam_forward.3} parent=5 // pred_check
      _
    $region10: #{cbam_forward.3} parent=5 // pred_check_branch
      %167 = sbr.rel (%p164) target = $region12
    $region11: #{cbam_forward.3} parent=5 // pred_region
      %s168 = ssub.s32 %s13, 1
      // Predicated region
      $region13: #{cbam_forward.3} parent=11 // pred_check
        %p169 = pneg %p86
      $region14: #{cbam_forward.3} parent=11 // pred_check_branch
        %171 = sbr.rel (%p169) target = $region16
      $region15: #{cbam_forward.3} parent=11 // pred_region
        _
      $region16: #{cbam_forward.3} parent=11 // pred_fallthru
        _
      // Predicated region
      $region17: #{cbam_forward.3} parent=11 // pred_check
        %p172 = pneg %p107
      $region18: #{cbam_forward.3} parent=11 // pred_check_branch
        %174 = sbr.rel (%p172) target = $region20
      $region19: #{cbam_forward.3} parent=11 // pred_region
        _
      $region20: #{cbam_forward.3} parent=11 // pred_fallthru
        _
      // Predicated region
      $region21: #{cbam_forward.3} parent=11 // pred_check
        %p175 = pneg %p128
      $region22: #{cbam_forward.3} parent=11 // pred_check_branch
        %177 = sbr.rel (%p175) target = $region24
      $region23: #{cbam_forward.3} parent=11 // pred_region
        _
      $region24: #{cbam_forward.3} parent=11 // pred_fallthru
        _
    $region12: #{cbam_forward.3} parent=5 // pred_fallthru
      _
    %p178 = scmp.lt.s32.totalorder %s13, 2
    // Predicated region
    $region25: #{cbam_forward.3} parent=5 // pred_check
      %p179 = pneg %p178
    $region26: #{cbam_forward.3} parent=5 // pred_check_branch
      %181 = sbr.rel (%p179) target = $region28
    $region27: #{cbam_forward.3} parent=5 // pred_region
      // Predicated region
      $region29: #{cbam_forward.3} parent=27 // pred_check
        %p182 = pneg %p33
      $region30: #{cbam_forward.3} parent=27 // pred_check_branch
        %184 = sbr.rel (%p182) target = $region32
      $region31: #{cbam_forward.3} parent=27 // pred_region
        %p185 = scmp.lt.s32.totalorder %s13, 1
        %s186 = scalar_select %p185, %s13, 1
        %s187 = smul.addr %s186, 2
        %s188 = smul.addr %s187, 4
        %s189 = scalar_lea.vmem %s0, %s188
      $region32: #{cbam_forward.3} parent=27 // pred_fallthru
        _
      // Predicated region
      $region33: #{cbam_forward.3} parent=27 // pred_check
        %p190 = pneg %p59
      $region34: #{cbam_forward.3} parent=27 // pred_check_branch
        %192 = sbr.rel (%p190) target = $region36
      $region35: #{cbam_forward.3} parent=27 // pred_region
        %p193 = scmp.lt.s32.totalorder %s13, 1
        %s194 = scalar_select %p193, %s13, 1
        %s195 = smul.addr %s194, 4
        %s196 = scalar_lea.vmem %s1, %s195
      $region36: #{cbam_forward.3} parent=27 // pred_fallthru
        _
    $region28: #{cbam_forward.3} parent=5 // pred_fallthru
      _
    %p197 = scmp.le.s32.totalorder 1, %s13
    %p198 = scmp.lt.s32.totalorder %s13, 3
    %p199 = pnand %p197, %p198
    %p200 = pneg %p199
    // Predicated region
    $region37: #{cbam_forward.3} parent=5 // pred_check
      _
    $region38: #{cbam_forward.3} parent=5 // pred_check_branch
      %202 = sbr.rel (%p199) target = $region40
    $region39: #{cbam_forward.3} parent=5 // pred_region
      %s203 = ssub.s32 %s13, 1
      %p204 = scmp.lt.s32.totalorder %s18, 1
      %s205 = scalar_select %p204, %s18, 1
      %s206 = smul.addr %s205, 2
      %s207 = smul.addr %s206, 4
      %s208 = scalar_lea.vmem %s0, %s207
      %p209 = pneg %p39
      %p210 = pneg %p36
      %p211 = scmp.lt.s32.totalorder %s18, 1
      %s212 = scalar_select %p211, %s18, 1
      %s213 = smul.addr %s212, 4
      %s214 = scalar_lea.vmem %s1, %s213
      %p215 = pneg %p65
      %p216 = pneg %p62
      %p217 = pneg %p86
      %p218 = pneg %p83
      %p219 = pneg %p107
      %p220 = pneg %p104
      %p221 = pneg %p128
      %p222 = pneg %p125
      %p223 = pneg %p154
      %p224 = pneg %p151
      %p225 = scmp.lt.s32.totalorder %s18, 1
      %s226 = scalar_select %p225, %s18, 1
      %s227 = smul.addr %s226, 2
      %s228 = smul.addr %s227, 4
      %s229 = scalar_lea.vmem %s5, %s228
      %p230 = scmp.lt.s32.totalorder %s18, 1
      %s231 = scalar_select %p230, %s18, 1
      %s232 = smul.addr %s231, 2
      %s233 = smul.addr %s232, 4
      %s234 = scalar_lea.vmem %s0, %s233
      %p235 = scmp.lt.s32.totalorder %s18, 1
      %s236 = scalar_select %p235, %s18, 1
      %s237 = smul.addr %s236, 4
      %s238 = scalar_lea.vmem %s1, %s237
      %p239 = scmp.lt.s32.totalorder %s18, 1
      %s240 = scalar_select %p239, %s18, 1
      %s241 = smul.addr %s240, 2
      %s242 = smul.addr %s241, 4
      %s243 = scalar_lea.vmem %s5, %s242
      %v244 = vld [vmem:[%s234] sm:$0xff]
      %v245 = vld [vmem:[%s238] sm:$0xf]
      %247 = vset.pattern.permute.xlu0 0
      %248 = vperm.xlu0 %247, %v245
      %v249 = vpop.permute.xlu0 %248
      %v251 = vunpack.c.l.s4 839922192
      %v252 = vunpack.c.0.s8 %v251
      %v253 = vperm.slane %v249, %v252
      %v255 = vmul.f32 %v244, %v253
      %257 = vst [vmem:[#allocation1] ss:$2 sm:$0xff] %v255
      %v258 = vld.sshfl [vmem:[#allocation1] sm:$0xff pattern:$0x75316420]
      %v259 = vld.sshfl [vmem:[#allocation1 + $0x8] sm:$0xff pattern:$0x75316420]
      %vm262 = vcmask 1043456
      %v263 = vsel %vm262, %v258, 0.0
      %v264 = vrot.slane %v263, 4
      %v265 = vadd.f32 %v263, %v264
      %v266 = vrot.slane %v265, 2
      %v267 = vadd.f32 %v265, %v266
      %v268 = vrot.slane %v267, 1
      %v269 = vadd.f32 %v267, %v268
      %v270 = vsel %vm262, %v259, 0.0
      %v271 = vrot.slane %v270, 4
      %v272 = vadd.f32 %v270, %v271
      %v273 = vrot.slane %v272, 2
      %v274 = vadd.f32 %v272, %v273
      %v275 = vrot.slane %v274, 1
      %v276 = vadd.f32 %v274, %v275
      %v277 = vmul.f32 %v269, 0.25
      %v278 = vmul.f32 %v276, 0.25
      %279 = vst [vmem:[#allocation1] ss:$2 sm:$0xff] %v255
      %v280 = vld.sshfl [vmem:[#allocation1] sm:$0xff pattern:$0x75316420]
      %v281 = vld.sshfl [vmem:[#allocation1 + $0x8] sm:$0xff pattern:$0x75316420]
      %v284 = vsel %vm262, %v280, -inf
      %v285 = vrot.slane %v284, 4
      %v286 = vmax.f32 %v284, %v285
      %v287 = vrot.slane %v286, 2
      %v288 = vmax.f32 %v286, %v287
      %v289 = vrot.slane %v288, 1
      %v290 = vmax.f32 %v288, %v289
      %v291 = vsel %vm262, %v281, -inf
      %v292 = vrot.slane %v291, 4
      %v293 = vmax.f32 %v291, %v292
      %v294 = vrot.slane %v293, 2
      %v295 = vmax.f32 %v293, %v294
      %v296 = vrot.slane %v295, 1
      %v297 = vmax.f32 %v295, %v296
      %v298 = vld [vmem:[%s2] sm:$0xff]
      %v299 = vld [vmem:[%s2 + $0x8] sm:$0xff]
      %v300 = vld [vmem:[%s2 + $0x10] sm:$0xff]
      %v301 = vld [vmem:[%s2 + $0x18] sm:$0xff]
      %v302 = vld [vmem:[%s2 + $0x20] sm:$0xff]
      %v303 = vld [vmem:[%s2 + $0x28] sm:$0xff]
      %v304 = vld [vmem:[%s2 + $0x30] sm:$0xff]
      %v305 = vld [vmem:[%s2 + $0x38] sm:$0xff]
      %v306 = vld [vmem:[%s2 + $0x40] sm:$0xff]
      %v307 = vld [vmem:[%s2 + $0x48] sm:$0xff]
      %v308 = vld [vmem:[%s2 + $0x50] sm:$0xff]
      %v309 = vld [vmem:[%s2 + $0x58] sm:$0xff]
      %v310 = vld [vmem:[%s2 + $0x60] sm:$0xff]
      %v311 = vld [vmem:[%s2 + $0x68] sm:$0xff]
      %v312 = vld [vmem:[%s2 + $0x70] sm:$0xff]
      %v313 = vld [vmem:[%s2 + $0x78] sm:$0xff]
      %v314 = vld [vmem:[%s2 + $0x80] sm:$0xff]
      %v315 = vld [vmem:[%s2 + $0x88] sm:$0xff]
      %v316 = vld [vmem:[%s2 + $0x90] sm:$0xff]
      %v317 = vld [vmem:[%s2 + $0x98] sm:$0xff]
      %v318 = vld [vmem:[%s2 + $0xa0] sm:$0xff]
      %v319 = vld [vmem:[%s2 + $0xa8] sm:$0xff]
      %v320 = vld [vmem:[%s2 + $0xb0] sm:$0xff]
      %v321 = vld [vmem:[%s2 + $0xb8] sm:$0xff]
      %v322 = vld [vmem:[%s2 + $0xc0] sm:$0xff]
      %v323 = vld [vmem:[%s2 + $0xc8] sm:$0xff]
      %v324 = vld [vmem:[%s2 + $0xd0] sm:$0xff]
      %v325 = vld [vmem:[%s2 + $0xd8] sm:$0xff]
      %v326 = vld [vmem:[%s2 + $0xe0] sm:$0xff]
      %v327 = vld [vmem:[%s2 + $0xe8] sm:$0xff]
      %v328 = vld [vmem:[%s2 + $0xf0] sm:$0xff]
      %v329 = vld [vmem:[%s2 + $0xf8] sm:$0xff]
      %v330 = vld [vmem:[%s2 + $0x100] sm:$0xff]
      %v331 = vld [vmem:[%s2 + $0x108] sm:$0xff]
      %v332 = vld [vmem:[%s2 + $0x110] sm:$0xff]
      %v333 = vld [vmem:[%s2 + $0x118] sm:$0xff]
      %v334 = vld [vmem:[%s2 + $0x120] sm:$0xff]
      %v335 = vld [vmem:[%s2 + $0x128] sm:$0xff]
      %v336 = vld [vmem:[%s2 + $0x130] sm:$0xff]
      %v337 = vld [vmem:[%s2 + $0x138] sm:$0xff]
      %v338 = vld [vmem:[%s2 + $0x140] sm:$0xff]
      %v339 = vld [vmem:[%s2 + $0x148] sm:$0xff]
      %v340 = vld [vmem:[%s2 + $0x150] sm:$0xff]
      %v341 = vld [vmem:[%s2 + $0x158] sm:$0xff]
      %v342 = vld [vmem:[%s2 + $0x160] sm:$0xff]
      %v343 = vld [vmem:[%s2 + $0x168] sm:$0xff]
      %v344 = vld [vmem:[%s2 + $0x170] sm:$0xff]
      %v345 = vld [vmem:[%s2 + $0x178] sm:$0xff]
      %v346 = vld [vmem:[%s2 + $0x180] sm:$0xff]
      %v347 = vld [vmem:[%s2 + $0x188] sm:$0xff]
      %v348 = vld [vmem:[%s2 + $0x190] sm:$0xff]
      %v349 = vld [vmem:[%s2 + $0x198] sm:$0xff]
      %v350 = vld [vmem:[%s2 + $0x1a0] sm:$0xff]
      %v351 = vld [vmem:[%s2 + $0x1a8] sm:$0xff]
      %v352 = vld [vmem:[%s2 + $0x1b0] sm:$0xff]
      %v353 = vld [vmem:[%s2 + $0x1b8] sm:$0xff]
      %v354 = vld [vmem:[%s2 + $0x1c0] sm:$0xff]
      %v355 = vld [vmem:[%s2 + $0x1c8] sm:$0xff]
      %v356 = vld [vmem:[%s2 + $0x1d0] sm:$0xff]
      %v357 = vld [vmem:[%s2 + $0x1d8] sm:$0xff]
      %v358 = vld [vmem:[%s2 + $0x1e0] sm:$0xff]
      %v359 = vld [vmem:[%s2 + $0x1e8] sm:$0xff]
      %v360 = vld [vmem:[%s2 + $0x1f0] sm:$0xff]
      %v361 = vld [vmem:[%s2 + $0x1f8] sm:$0xff]
      %v362 = vld [vmem:[%s3] sm:$0xff]
      %v363 = vld [vmem:[%s3 + $0x8] sm:$0xff]
      %v364 = vld [vmem:[%s3 + $0x10] sm:$0xff]
      %v365 = vld [vmem:[%s3 + $0x18] sm:$0xff]
      %v366 = vld [vmem:[%s3 + $0x20] sm:$0xff]
      %v367 = vld [vmem:[%s3 + $0x28] sm:$0xff]
      %v368 = vld [vmem:[%s3 + $0x30] sm:$0xff]
      %v369 = vld [vmem:[%s3 + $0x38] sm:$0xff]
      %v370 = vld [vmem:[%s3 + $0x40] sm:$0xff]
      %v371 = vld [vmem:[%s3 + $0x48] sm:$0xff]
      %v372 = vld [vmem:[%s3 + $0x50] sm:$0xff]
      %v373 = vld [vmem:[%s3 + $0x58] sm:$0xff]
      %v374 = vld [vmem:[%s3 + $0x60] sm:$0xff]
      %v375 = vld [vmem:[%s3 + $0x68] sm:$0xff]
      %v376 = vld [vmem:[%s3 + $0x70] sm:$0xff]
      %v377 = vld [vmem:[%s3 + $0x78] sm:$0xff]
      %v378 = vld [vmem:[%s3 + $0x80] sm:$0xff]
      %v379 = vld [vmem:[%s3 + $0x88] sm:$0xff]
      %v380 = vld [vmem:[%s3 + $0x90] sm:$0xff]
      %v381 = vld [vmem:[%s3 + $0x98] sm:$0xff]
      %v382 = vld [vmem:[%s3 + $0xa0] sm:$0xff]
      %v383 = vld [vmem:[%s3 + $0xa8] sm:$0xff]
      %v384 = vld [vmem:[%s3 + $0xb0] sm:$0xff]
      %v385 = vld [vmem:[%s3 + $0xb8] sm:$0xff]
      %v386 = vld [vmem:[%s3 + $0xc0] sm:$0xff]
      %v387 = vld [vmem:[%s3 + $0xc8] sm:$0xff]
      %v388 = vld [vmem:[%s3 + $0xd0] sm:$0xff]
      %v389 = vld [vmem:[%s3 + $0xd8] sm:$0xff]
      %v390 = vld [vmem:[%s3 + $0xe0] sm:$0xff]
      %v391 = vld [vmem:[%s3 + $0xe8] sm:$0xff]
      %v392 = vld [vmem:[%s3 + $0xf0] sm:$0xff]
      %v393 = vld [vmem:[%s3 + $0xf8] sm:$0xff]
      %v394 = vld [vmem:[%s3 + $0x100] sm:$0xff]
      %v395 = vld [vmem:[%s3 + $0x108] sm:$0xff]
      %v396 = vld [vmem:[%s3 + $0x110] sm:$0xff]
      %v397 = vld [vmem:[%s3 + $0x118] sm:$0xff]
      %v398 = vld [vmem:[%s3 + $0x120] sm:$0xff]
      %v399 = vld [vmem:[%s3 + $0x128] sm:$0xff]
      %v400 = vld [vmem:[%s3 + $0x130] sm:$0xff]
      %v401 = vld [vmem:[%s3 + $0x138] sm:$0xff]
      %v402 = vld [vmem:[%s3 + $0x140] sm:$0xff]
      %v403 = vld [vmem:[%s3 + $0x148] sm:$0xff]
      %v404 = vld [vmem:[%s3 + $0x150] sm:$0xff]
      %v405 = vld [vmem:[%s3 + $0x158] sm:$0xff]
      %v406 = vld [vmem:[%s3 + $0x160] sm:$0xff]
      %v407 = vld [vmem:[%s3 + $0x168] sm:$0xff]
      %v408 = vld [vmem:[%s3 + $0x170] sm:$0xff]
      %v409 = vld [vmem:[%s3 + $0x178] sm:$0xff]
      %v410 = vld [vmem:[%s3 + $0x180] sm:$0xff]
      %v411 = vld [vmem:[%s3 + $0x188] sm:$0xff]
      %v412 = vld [vmem:[%s3 + $0x190] sm:$0xff]
      %v413 = vld [vmem:[%s3 + $0x198] sm:$0xff]
      %v414 = vld [vmem:[%s3 + $0x1a0] sm:$0xff]
      %v415 = vld [vmem:[%s3 + $0x1a8] sm:$0xff]
      %v416 = vld [vmem:[%s3 + $0x1b0] sm:$0xff]
      %v417 = vld [vmem:[%s3 + $0x1b8] sm:$0xff]
      %v418 = vld [vmem:[%s3 + $0x1c0] sm:$0xff]
      %v419 = vld [vmem:[%s3 + $0x1c8] sm:$0xff]
      %v420 = vld [vmem:[%s3 + $0x1d0] sm:$0xff]
      %v421 = vld [vmem:[%s3 + $0x1d8] sm:$0xff]
      %v422 = vld [vmem:[%s3 + $0x1e0] sm:$0xff]
      %v423 = vld [vmem:[%s3 + $0x1e8] sm:$0xff]
      %v424 = vld [vmem:[%s3 + $0x1f0] sm:$0xff]
      %v425 = vld [vmem:[%s3 + $0x1f8] sm:$0xff]
      %426 = vmatpush.msra.mxu0 %v392
      %427 = vmatpush.msra.mxu0 %v390
      %428 = vmatpush.msra.mxu0 %v388
      %429 = vmatpush.msra.mxu0 %v386
      %430 = vmatpush.msra.mxu0 %v384
      %431 = vmatpush.msra.mxu0 %v382
      %432 = vmatpush.msra.mxu0 %v380
      %433 = vmatpush.msra.mxu0 %v378
      %434 = vmatpush.msra.mxu0 %v376
      %435 = vmatpush.msra.mxu0 %v374
      %436 = vmatpush.msra.mxu0 %v372
      %437 = vmatpush.msra.mxu0 %v370
      %438 = vmatpush.msra.mxu0 %v368
      %439 = vmatpush.msra.mxu0 %v366
      %440 = vmatpush.msra.mxu0 %v364
      %441 = vmatpush.msra.mxu0 %v362
      %442 = vmatmul.f32.gmra.mxu0 %v290
      %v443 = vpop.f32.mrf.mxu0
      %v444 = vadd.f32 0.0, %v443
      %445 = vdwg.mxu0
      %446 = vmatpush.msra.mxu0 %v424
      %447 = vmatpush.msra.mxu0 %v422
      %448 = vmatpush.msra.mxu0 %v420
      %449 = vmatpush.msra.mxu0 %v418
      %450 = vmatpush.msra.mxu0 %v416
      %451 = vmatpush.msra.mxu0 %v414
      %452 = vmatpush.msra.mxu0 %v412
      %453 = vmatpush.msra.mxu0 %v410
      %454 = vmatpush.msra.mxu0 %v408
      %455 = vmatpush.msra.mxu0 %v406
      %456 = vmatpush.msra.mxu0 %v404
      %457 = vmatpush.msra.mxu0 %v402
      %458 = vmatpush.msra.mxu0 %v400
      %459 = vmatpush.msra.mxu0 %v398
      %460 = vmatpush.msra.mxu0 %v396
      %461 = vmatpush.msra.mxu0 %v394
      %462 = vmatmul.f32.gmra.mxu0 %v297
      %v463 = vpop.f32.mrf.mxu0
      %v464 = vadd.f32 %v444, %v463
      %465 = vdwg.mxu0
      %466 = vmatpush.msra.mxu0 %v393
      %467 = vmatpush.msra.mxu0 %v391
      %468 = vmatpush.msra.mxu0 %v389
      %469 = vmatpush.msra.mxu0 %v387
      %470 = vmatpush.msra.mxu0 %v385
      %471 = vmatpush.msra.mxu0 %v383
      %472 = vmatpush.msra.mxu0 %v381
      %473 = vmatpush.msra.mxu0 %v379
      %474 = vmatpush.msra.mxu0 %v377
      %475 = vmatpush.msra.mxu0 %v375
      %476 = vmatpush.msra.mxu0 %v373
      %477 = vmatpush.msra.mxu0 %v371
      %478 = vmatpush.msra.mxu0 %v369
      %479 = vmatpush.msra.mxu0 %v367
      %480 = vmatpush.msra.mxu0 %v365
      %481 = vmatpush.msra.mxu0 %v363
      %482 = vmatmul.f32.gmra.mxu0 %v290
      %v483 = vpop.f32.mrf.mxu0
      %v484 = vadd.f32 0.0, %v483
      %485 = vdwg.mxu0
      %486 = vmatpush.msra.mxu0 %v425
      %487 = vmatpush.msra.mxu0 %v423
      %488 = vmatpush.msra.mxu0 %v421
      %489 = vmatpush.msra.mxu0 %v419
      %490 = vmatpush.msra.mxu0 %v417
      %491 = vmatpush.msra.mxu0 %v415
      %492 = vmatpush.msra.mxu0 %v413
      %493 = vmatpush.msra.mxu0 %v411
      %494 = vmatpush.msra.mxu0 %v409
      %495 = vmatpush.msra.mxu0 %v407
      %496 = vmatpush.msra.mxu0 %v405
      %497 = vmatpush.msra.mxu0 %v403
      %498 = vmatpush.msra.mxu0 %v401
      %499 = vmatpush.msra.mxu0 %v399
      %500 = vmatpush.msra.mxu0 %v397
      %501 = vmatpush.msra.mxu0 %v395
      %502 = vmatmul.f32.gmra.mxu0 %v297
      %v503 = vpop.f32.mrf.mxu0
      %v504 = vadd.f32 %v484, %v503
      %505 = vdwg.mxu0
      %506 = vmatpush.msra.mxu0 %v328
      %507 = vmatpush.msra.mxu0 %v326
      %508 = vmatpush.msra.mxu0 %v324
      %509 = vmatpush.msra.mxu0 %v322
      %510 = vmatpush.msra.mxu0 %v320
      %511 = vmatpush.msra.mxu0 %v318
      %512 = vmatpush.msra.mxu0 %v316
      %513 = vmatpush.msra.mxu0 %v314
      %514 = vmatpush.msra.mxu0 %v312
      %515 = vmatpush.msra.mxu0 %v310
      %516 = vmatpush.msra.mxu0 %v308
      %517 = vmatpush.msra.mxu0 %v306
      %518 = vmatpush.msra.mxu0 %v304
      %519 = vmatpush.msra.mxu0 %v302
      %520 = vmatpush.msra.mxu0 %v300
      %521 = vmatpush.msra.mxu0 %v298
      %522 = vmatmul.f32.gmra.mxu0 %v277
      %v523 = vpop.f32.mrf.mxu0
      %v524 = vadd.f32 %v464, %v523
      %525 = vdwg.mxu0
      %526 = vmatpush.msra.mxu0 %v360
      %527 = vmatpush.msra.mxu0 %v358
      %528 = vmatpush.msra.mxu0 %v356
      %529 = vmatpush.msra.mxu0 %v354
      %530 = vmatpush.msra.mxu0 %v352
      %531 = vmatpush.msra.mxu0 %v350
      %532 = vmatpush.msra.mxu0 %v348
      %533 = vmatpush.msra.mxu0 %v346
      %534 = vmatpush.msra.mxu0 %v344
      %535 = vmatpush.msra.mxu0 %v342
      %536 = vmatpush.msra.mxu0 %v340
      %537 = vmatpush.msra.mxu0 %v338
      %538 = vmatpush.msra.mxu0 %v336
      %539 = vmatpush.msra.mxu0 %v334
      %540 = vmatpush.msra.mxu0 %v332
      %541 = vmatpush.msra.mxu0 %v330
      %542 = vmatmul.f32.gmra.mxu0 %v278
      %v543 = vpop.f32.mrf.mxu0
      %v544 = vadd.f32 %v524, %v543
      %545 = vdwg.mxu0
      %546 = vmatpush.msra.mxu0 %v329
      %547 = vmatpush.msra.mxu0 %v327
      %548 = vmatpush.msra.mxu0 %v325
      %549 = vmatpush.msra.mxu0 %v323
      %550 = vmatpush.msra.mxu0 %v321
      %551 = vmatpush.msra.mxu0 %v319
      %552 = vmatpush.msra.mxu0 %v317
      %553 = vmatpush.msra.mxu0 %v315
      %554 = vmatpush.msra.mxu0 %v313
      %555 = vmatpush.msra.mxu0 %v311
      %556 = vmatpush.msra.mxu0 %v309
      %557 = vmatpush.msra.mxu0 %v307
      %558 = vmatpush.msra.mxu0 %v305
      %559 = vmatpush.msra.mxu0 %v303
      %560 = vmatpush.msra.mxu0 %v301
      %561 = vmatpush.msra.mxu0 %v299
      %562 = vmatmul.f32.gmra.mxu0 %v277
      %v563 = vpop.f32.mrf.mxu0
      %v564 = vadd.f32 %v504, %v563
      %565 = vdwg.mxu0
      %566 = vmatpush.msra.mxu0 %v361
      %567 = vmatpush.msra.mxu0 %v359
      %568 = vmatpush.msra.mxu0 %v357
      %569 = vmatpush.msra.mxu0 %v355
      %570 = vmatpush.msra.mxu0 %v353
      %571 = vmatpush.msra.mxu0 %v351
      %572 = vmatpush.msra.mxu0 %v349
      %573 = vmatpush.msra.mxu0 %v347
      %574 = vmatpush.msra.mxu0 %v345
      %575 = vmatpush.msra.mxu0 %v343
      %576 = vmatpush.msra.mxu0 %v341
      %577 = vmatpush.msra.mxu0 %v339
      %578 = vmatpush.msra.mxu0 %v337
      %579 = vmatpush.msra.mxu0 %v335
      %580 = vmatpush.msra.mxu0 %v333
      %581 = vmatpush.msra.mxu0 %v331
      %582 = vmatmul.f32.gmra.mxu0 %v278
      %v583 = vpop.f32.mrf.mxu0
      %v584 = vadd.f32 %v564, %v583
      %585 = vdwg.mxu0
      %v586 = vld [vmem:[#allocation2] sm:$0x1]
      %588 = vset.pattern.permute.xlu0 0
      %589 = vperm.xlu0 %588, %v586
      %v590 = vpop.permute.xlu0 %589
      %v592 = vperm.slane %v590, 0
      %v593 = vadd.f32 %v544, %v592
      %v594 = vadd.f32 %v584, %v592
      %v595 = vxor.u32 %v593, 2147483648
      %v596 = vxor.u32 %v594, 2147483648
      %v597 = vmul.f32 %v595, 1.442695
      %v598 = vpow.pop %v597
      %v599 = vmul.f32 %v596, 1.442695
      %v600 = vpow.pop %v599
      %v601 = vadd.f32 %v598, 1.0
      %v602 = vadd.f32 %v600, 1.0
      %v603 = vrcp.pop %v601
      %v604 = vmul.f32 %v601, %v603
      %v605 = vsub.f32 1.0, %v604
      %v606 = vmul.f32 %v603, %v605
      %v607 = vadd.f32 %v603, %v606
      %vm608 = vweird.f32 %v601
      %vm609 = vweird.f32 %v603
      %vm610 = vmor %vm608, %vm609
      %v611 = vsel %vm610, %v603, %v607
      %v612 = vand.u32 2147483647, %v601
      %vm613 = vcmp.eq.f32.partialorder %v612, 8.507059e+37
      %v614 = vand.u32 %v601, 2147483648
      %v615 = vor.u32 1.1754944e-38, %v614
      %v616 = vsel %vm613, %v615, %v611
      %v617 = vmul.f32 1.0, %v616
      %v618 = vrcp.pop %v602
      %v619 = vmul.f32 %v602, %v618
      %v620 = vsub.f32 1.0, %v619
      %v621 = vmul.f32 %v618, %v620
      %v622 = vadd.f32 %v618, %v621
      %vm623 = vweird.f32 %v602
      %vm624 = vweird.f32 %v618
      %vm625 = vmor %vm623, %vm624
      %v626 = vsel %vm625, %v618, %v622
      %v627 = vand.u32 2147483647, %v602
      %vm628 = vcmp.eq.f32.partialorder %v627, 8.507059e+37
      %v629 = vand.u32 %v602, 2147483648
      %v630 = vor.u32 1.1754944e-38, %v629
      %v631 = vsel %vm628, %v630, %v626
      %v632 = vmul.f32 1.0, %v631
      %v633 = vperm.slane %v617, 0
      %v634 = vperm.slane %v632, 0
      %v637 = vrot.slane %v634, 4
      %v638 = vsel %vm262, %v633, %v637
      %v640 = vmul.f32 %v255, %v638
      %641 = vst [vmem:[%s243] sm:$0xff] %v640
      %p642 = scmp.lt.s32.totalorder %s18, 1
      %s643 = scalar_select %p642, %s18, 1
      %s644 = smul.addr %s643, 2
      %s645 = smul.addr %s644, 4
      %s646 = scalar_lea.vmem %s5, %s645
      // Predicated region
      $region41: #{cbam_forward.3} parent=39 // pred_check
        %p647 = pneg %p151
      $region42: #{cbam_forward.3} parent=39 // pred_check_branch
        %649 = sbr.rel (%p647) target = $region44
      $region43: #{cbam_forward.3} parent=39 // pred_region
        _
      $region44: #{cbam_forward.3} parent=39 // pred_fallthru
        _
    $region40: #{cbam_forward.3} parent=5 // pred_fallthru
      _
    %p650 = scmp.le.s32.totalorder 2, %s13
    // Predicated region
    $region45: #{cbam_forward.3} parent=5 // pred_check
      %p651 = pneg %p650
    $region46: #{cbam_forward.3} parent=5 // pred_check_branch
      %653 = sbr.rel (%p651) target = $region48
    $region47: #{cbam_forward.3} parent=5 // pred_region
      %s654 = ssub.s32 %s13, 2
      // Predicated region
      $region49: #{cbam_forward.3} parent=47 // pred_check
        %p655 = pneg %p157
      $region50: #{cbam_forward.3} parent=47 // pred_check_branch
        %657 = sbr.rel (%p655) target = $region52
      $region51: #{cbam_forward.3} parent=47 // pred_region
        %p658 = scmp.lt.s32.totalorder %s19, 1
        %s659 = scalar_select %p658, %s19, 1
        %s660 = smul.addr %s659, 2
        %s661 = smul.addr %s660, 4
        %s662 = scalar_lea.vmem %s5, %s661
      $region52: #{cbam_forward.3} parent=47 // pred_fallthru
        _
    $region48: #{cbam_forward.3} parent=5 // pred_fallthru
      _
  $region6: #{cbam_forward.3} parent=0 // loop_footer
    %s17 = sadd.s32 1, %s13
  $region7: #{cbam_forward.3} parent=0 // loop_footer_branch
    %12 = sbr.rel target = $region3
  $region8: #{cbam_forward.3} parent=0 // loop_exit
    _

</llo_original>
